<compile_context>
chip_gen: v7x
topology: tpu7x:2x2x1
jax: 0.10.0
libtpu: 0.0.40
codegen_flags: <defaults>
</compile_context>

<pallas_src>
import functools

import jax
import jax.numpy as jnp
from jax.experimental import pallas as pl
from jax.experimental.pallas import tpu as pltpu


# ----------------------------------------------------------------------------- fused kernel
def _encoder_layer_kernel(x_ref, lnw_ref, lnb_ref,
                          tw0_ref, tw1_ref, tw2_ref, tw3_ref,
                          alpha_ref, w1_ref, b1_ref, w2_ref, b2_ref,
                          o_ref, *, T, eps):
    f32 = jnp.float32
    x = x_ref[...].astype(f32)          # (M, D) activations, VMEM-resident throughout
    lnw = lnw_ref[...].astype(f32)      # (1, D)
    lnb = lnb_ref[...].astype(f32)      # (1, D)
    M = x.shape[0]

    # Hoisted boundary masks shared by all four series_decomp calls.  Rows are
    # group-major (row = g*T + t), so masking t==0 / t==T-1 simultaneously applies the
    # edge replication inside each window AND prevents groups bleeding into each other.
    t_idx = jax.lax.broadcasted_iota(jnp.int32, x.shape, 0) % T
    is_first = t_idx == 0
    is_last = t_idx == (T - 1)

    def decomp(v):
        # Autoformer series_decomp (kernel=3, edge-replicated moving average over T):
        #   trend[t] = (v[max(t-1,0)] + v[t] + v[min(t+1,T-1)]) / 3
        prev = jnp.where(is_first, v, pltpu.roll(v, 1, axis=0))
        nxt = jnp.where(is_last, v, pltpu.roll(v, M - 1, axis=0))
        trend = (prev + v + nxt) * (1.0 / 3.0)
        return v - trend, trend

    def norm(raw, res):
        # TODO(synk): NormLayer(history_steps, d_model) source not provided;
        # implemented as LayerNorm over d_model of (x_raw + x_res).
        h = raw + res
        mu = jnp.mean(h, axis=-1, keepdims=True)
        var = jnp.mean((h - mu) ** 2, axis=-1, keepdims=True)
        return (h - mu) * jax.lax.rsqrt(var + eps) * lnw + lnb

    def lin(v, w_ref):                  # bias-free trend linear
        return jnp.dot(v, w_ref[...].astype(f32), preferred_element_type=f32)

    # ---- stage 1: decomp + trend0 + VM attention + norm
    x_res, x_trend = decomp(x)
    x_trend = lin(x_trend, tw0_ref)
    x_raw = x_res
    # TODO(synk): VMAttentionModule source not provided; treated as identity
    #             (output_attention=False -> attention weights are None).
    x_res = norm(x_raw, x_res)

    # ---- stage 2: decomp + trend1 + spatial message + norm
    x_res, t1 = decomp(x_res)
    x_trend = x_trend + lin(t1, tw1_ref)
    x_raw = x_res
    # TODO(synk): SpatialRelationModule source not provided; treated as identity
    #             (hence the adj LayerNorm it would consume is skipped entirely).
    x_res = norm(x_raw, x_res)

    # ---- stage 3: decomp + trend2 + temporal self/cross + alpha mix + norm
    x_res, t1 = decomp(x_res)
    x_trend = x_trend + lin(t1, tw2_ref)
    x_raw = x_res
    # TODO(synk): TemporalRelationModule / TemporalCrossRelationModule sources not
    #             provided; treated as identity.
    self_res = x_res
    cross_res = x_res
    # a@alpha + b@(1-alpha) == (a-b)@alpha + rowsum(b) broadcast across lanes
    mixed = (jnp.dot(self_res - cross_res, alpha_ref[...].astype(f32),
                     preferred_element_type=f32)
             + jnp.sum(cross_res, axis=-1, keepdims=True))
    x_res = norm(x_raw, mixed)

    # ---- stage 4: decomp + trend3 + feedforward + norm + trend add (distil=False path)
    x_res, t1 = decomp(x_res)
    x_trend = x_trend + lin(t1, tw3_ref)
    x_raw = x_res
    # TODO(synk): FeedForwardLayer source not provided; Linear->ReLU->Linear placeholder.
    h = jnp.maximum(
        jnp.dot(x_res, w1_ref[...].astype(f32), preferred_element_type=f32)
        + b1_ref[...].astype(f32), 0.0)
    ff = (jnp.dot(h, w2_ref[...].astype(f32), preferred_element_type=f32)
          + b2_ref[...].astype(f32))
    x_res = norm(x_raw, ff)

    # dropout_layer: inference mode -> identity
    o_ref[...] = (x_res + x_trend).astype(o_ref.dtype)


# ----------------------------------------------------------------------------- host-side params
def init_params(key, d_model, after_d_model):
    ks = jax.random.split(key, 7)
    s_in = 1.0 / float(d_model) ** 0.5
    s_h = 1.0 / float(after_d_model) ** 0.5
    p = {
        "ln_w": jnp.ones((1, d_model), jnp.float32),
        "ln_b": jnp.zeros((1, d_model), jnp.float32),
        # nn.Parameter(torch.rand(d_model, d_model))
        "alpha": jax.random.uniform(ks[4], (d_model, d_model), jnp.float32),
        "ffn_w1": jax.random.uniform(ks[5], (d_model, after_d_model), jnp.float32, -s_in, s_in),
        "ffn_b1": jnp.zeros((1, after_d_model), jnp.float32),
        "ffn_w2": jax.random.uniform(ks[6], (after_d_model, d_model), jnp.float32, -s_h, s_h),
        "ffn_b2": jnp.zeros((1, d_model), jnp.float32),
    }
    for i in range(4):  # trend_layer0..3 : nn.Linear(d_model, d_model, bias=False), stored (in,out)
        p[f"trend_w{i}"] = jax.random.uniform(ks[i], (d_model, d_model), jnp.float32, -s_in, s_in)
    return p


# ----------------------------------------------------------------------------- forward
def encoder_layer_forward(params, x, adj=None, instances_index_vm=None, attn_mask=None,
                          *, decomp_kernel=3, num_attention_layers=1, eps=1e-5):
    """x: (B, N, T, D).  adj/instances_index_vm/attn_mask are accepted for API parity but
    unused: their consumers (spatial / VM-attention modules) have no provided source."""
    if decomp_kernel != 3:
        # TODO(synk): general odd kernels need a (T,T) averaging-operator matmul or a
        # roll-per-offset loop with clip-to-group-start handling.
        raise NotImplementedError("only decomp_kernels=3 is implemented")
    B, N, T, D = x.shape
    M = B * N * T
    x2 = x.reshape(M, D)

    vspec = pl.BlockSpec(memory_space=pltpu.MemorySpace.VMEM)
    out2 = pl.pallas_call(
        functools.partial(_encoder_layer_kernel, T=T, eps=eps),
        out_shape=jax.ShapeDtypeStruct((M, D), x.dtype),
        in_specs=[vspec] * 12,
        out_specs=vspec,
    )(x2,
      params["ln_w"], params["ln_b"],
      params["trend_w0"], params["trend_w1"], params["trend_w2"], params["trend_w3"],
      params["alpha"],
      params["ffn_w1"], params["ffn_b1"], params["ffn_w2"], params["ffn_b2"])

    # TODO(synk): VMAttentionModule not provided; attention outputs are None (output_attention=False).
    vm_attention_list = [None] * num_attention_layers
    return out2.reshape(B, N, T, D), vm_attention_list


# ----------------------------------------------------------------------------- pure-JAX reference
def encoder_layer_reference(params, x, *, decomp_kernel=3, eps=1e-5):
    B, N, T, D = x.shape
    hi = jax.lax.Precision.HIGHEST

    def decomp(v):
        pad = (decomp_kernel - 1) // 2
        pos = jnp.clip(jnp.arange(T)[:, None] + jnp.arange(-pad, pad + 1)[None, :], 0, T - 1)
        trend = jnp.mean(v[:, :, pos, :], axis=3)
        return v - trend, trend

    def norm(raw, res):
        h = raw + res
        mu = jnp.mean(h, -1, keepdims=True)
        var = jnp.mean((h - mu) ** 2, -1, keepdims=True)
        return (h - mu) * jax.lax.rsqrt(var + eps) * params["ln_w"] + params["ln_b"]

    def mm(a, b):
        return jnp.matmul(a, b, precision=hi)

    x_res, x_trend = decomp(x)
    x_trend = mm(x_trend, params["trend_w0"])
    x_res = norm(x_res, x_res)

    x_res, t1 = decomp(x_res)
    x_trend = x_trend + mm(t1, params["trend_w1"])
    x_res = norm(x_res, x_res)

    x_res, t1 = decomp(x_res)
    x_trend = x_trend + mm(t1, params["trend_w2"])
    x_raw = x_res
    mixed = mm(x_res, params["alpha"]) + mm(x_res, 1.0 - params["alpha"])
    x_res = norm(x_raw, mixed)

    x_res, t1 = decomp(x_res)
    x_trend = x_trend + mm(t1, params["trend_w3"])
    x_raw = x_res
    h = jnp.maximum(mm(x_res, params["ffn_w1"]) + params["ffn_b1"], 0.0)
    ff = mm(h, params["ffn_w2"]) + params["ffn_b2"]
    x_res = norm(x_raw, ff)
    return x_res + x_trend


# ----------------------------------------------------------------------------- main
if __name__ == "__main__":
    B, N, T, D = 2, 4, 8, 32          # batch, num_instances, history_steps, d_model
    AFTER = 64                        # after_d_model (FFN hidden)
    key = jax.random.PRNGKey(0)
    k_x, k_adj, k_p = jax.random.split(key, 3)

    x = jax.random.normal(k_x, (B, N, T, D), jnp.float32)
    adj = jax.random.normal(k_adj, (B, N, N), jnp.float32)   # unused (placeholder spatial module)
    params = init_params(k_p, D, AFTER)

    out, vm_attention_list = encoder_layer_forward(
        params, x, adj, instances_index_vm=None, attn_mask=None,
        decomp_kernel=3, num_attention_layers=1)
    out = jax.block_until_ready(out)
    assert out.shape == (B, N, T, D)
    assert bool(jnp.all(jnp.isfinite(out)))

    ref = encoder_layer_reference(params, x, decomp_kernel=3)
    max_err = float(jnp.max(jnp.abs(out - ref)))
    assert max_err < 5e-2, f"kernel/reference mismatch, max abs err = {max_err}"

    print("KERNEL_OK")
</pallas_src>

<mosaic_0001>
module attributes {stable_mosaic.version = 11 : i64} {
  func.func @_encoder_layer_kernel(%arg0: memref<64x32xf32, #tpu.memory_space<vmem>>, %arg1: memref<1x32xf32, #tpu.memory_space<vmem>>, %arg2: memref<1x32xf32, #tpu.memory_space<vmem>>, %arg3: memref<32x32xf32, #tpu.memory_space<vmem>>, %arg4: memref<32x32xf32, #tpu.memory_space<vmem>>, %arg5: memref<32x32xf32, #tpu.memory_space<vmem>>, %arg6: memref<32x32xf32, #tpu.memory_space<vmem>>, %arg7: memref<32x32xf32, #tpu.memory_space<vmem>>, %arg8: memref<32x64xf32, #tpu.memory_space<vmem>>, %arg9: memref<1x64xf32, #tpu.memory_space<vmem>>, %arg10: memref<64x32xf32, #tpu.memory_space<vmem>>, %arg11: memref<1x32xf32, #tpu.memory_space<vmem>>, %arg12: memref<64x32xf32, #tpu.memory_space<vmem>>) attributes {dimension_semantics = [], scalar_prefetch = 0 : i64, scratch_operands = 0 : i64, tpu.core_type = #tpu.core_type<tc>} {
    %c0 = arith.constant 0 : index
    %c0_0 = arith.constant 0 : index
    %0 = vector.load %arg0[%c0, %c0_0] : memref<64x32xf32, #tpu.memory_space<vmem>>, vector<64x32xf32>
    %c0_1 = arith.constant 0 : index
    %c0_2 = arith.constant 0 : index
    %1 = vector.load %arg1[%c0_1, %c0_2] : memref<1x32xf32, #tpu.memory_space<vmem>>, vector<1x32xf32>
    %c0_3 = arith.constant 0 : index
    %c0_4 = arith.constant 0 : index
    %2 = vector.load %arg2[%c0_3, %c0_4] : memref<1x32xf32, #tpu.memory_space<vmem>>, vector<1x32xf32>
    %3 = tpu.iota {dimensions = array<i32: 0>} : vector<64x32xi32>
    %c8_i32 = arith.constant 8 : i32
    %c0_i32 = arith.constant 0 : i32
    %4 = arith.cmpi eq, %c8_i32, %c0_i32 : i32
    %c1_i32 = arith.constant 1 : i32
    %5 = arith.select %4, %c1_i32, %c8_i32 : i32
    %6 = vector.broadcast %5 : i32 to vector<64x32xi32>
    %7 = arith.remsi %3, %6 : vector<64x32xi32>
    %c0_i32_5 = arith.constant 0 : i32
    %8 = vector.broadcast %c0_i32_5 : i32 to vector<64x32xi32>
    %9 = arith.cmpi ne, %7, %8 : vector<64x32xi32>
    %c0_i32_6 = arith.constant 0 : i32
    %10 = vector.broadcast %c0_i32_6 : i32 to vector<64x32xi32>
    %11 = arith.cmpi slt, %7, %10 : vector<64x32xi32>
    %c0_i32_7 = arith.constant 0 : i32
    %12 = arith.cmpi slt, %5, %c0_i32_7 : i32
    %13 = vector.broadcast %12 : i1 to vector<64x32xi1>
    %14 = vector.broadcast %13 : vector<64x32xi1> to vector<64x32xi1>
    %15 = arith.xori %11, %14 : vector<64x32xi1>
    %16 = arith.andi %15, %9 : vector<64x32xi1>
    %17 = vector.broadcast %5 : i32 to vector<64x32xi32>
    %18 = arith.addi %7, %17 : vector<64x32xi32>
    %19 = arith.select %16, %18, %7 : vector<64x32xi1>, vector<64x32xi32>
    %c0_i32_8 = arith.constant 0 : i32
    %20 = vector.broadcast %c0_i32_8 : i32 to vector<64x32xi32>
    %21 = arith.cmpi eq, %19, %20 : vector<64x32xi32>
    %c7_i32 = arith.constant 7 : i32
    %22 = vector.broadcast %c7_i32 : i32 to vector<64x32xi32>
    %23 = arith.cmpi eq, %19, %22 : vector<64x32xi32>
    %c1_i32_9 = arith.constant 1 : i32
    %24 = tpu.dynamic_rotate %0 by %c1_i32_9 dim 0 : vector<64x32xf32>, i32 -> vector<64x32xf32>
    %25 = arith.select %21, %0, %24 : vector<64x32xi1>, vector<64x32xf32>
    %c63_i32 = arith.constant 63 : i32
    %26 = tpu.dynamic_rotate %0 by %c63_i32 dim 0 : vector<64x32xf32>, i32 -> vector<64x32xf32>
    %27 = arith.select %23, %0, %26 : vector<64x32xi1>, vector<64x32xf32>
    %28 = arith.addf %25, %0 : vector<64x32xf32>
    %29 = arith.addf %28, %27 : vector<64x32xf32>
    %cst = arith.constant 0.333333343 : f32
    %30 = vector.broadcast %cst : f32 to vector<64x32xf32>
    %31 = arith.mulf %29, %30 : vector<64x32xf32>
    %32 = arith.subf %0, %31 : vector<64x32xf32>
    %c0_10 = arith.constant 0 : index
    %c0_11 = arith.constant 0 : index
    %33 = vector.load %arg3[%c0_10, %c0_11] : memref<32x32xf32, #tpu.memory_space<vmem>>, vector<32x32xf32>
    %cst_12 = arith.constant dense<0.000000e+00> : vector<64x32xf32>
    %34 = tpu.matmul %31, %33, %cst_12 {dimension_numbers = #tpu.dot_dimension_numbers<[1], [0], [0], [1], [0, 0, 1, 1], [], []>} : vector<64x32xf32>, vector<32x32xf32>, vector<64x32xf32> -> vector<64x32xf32>
    %35 = arith.addf %32, %32 : vector<64x32xf32>
    %cst_13 = arith.constant dense<0.000000e+00> : vector<64xf32>
    %36 = vector.multi_reduction <add>, %35, %cst_13 [1] : vector<64x32xf32> to vector<64xf32>
    %37 = vector.shape_cast %36 : vector<64xf32> to vector<64x1xf32>
    %cst_14 = arith.constant 3.200000e+01 : f32
    %38 = vector.broadcast %cst_14 : f32 to vector<64x1xf32>
    %39 = arith.divf %37, %38 : vector<64x1xf32>
    %40 = vector.broadcast %39 : vector<64x1xf32> to vector<64x32xf32>
    %41 = arith.subf %35, %40 : vector<64x32xf32>
    %42 = arith.mulf %41, %41 : vector<64x32xf32>
    %cst_15 = arith.constant dense<0.000000e+00> : vector<64xf32>
    %43 = vector.multi_reduction <add>, %42, %cst_15 [1] : vector<64x32xf32> to vector<64xf32>
    %44 = vector.shape_cast %43 : vector<64xf32> to vector<64x1xf32>
    %cst_16 = arith.constant 3.200000e+01 : f32
    %45 = vector.broadcast %cst_16 : f32 to vector<64x1xf32>
    %46 = arith.divf %44, %45 : vector<64x1xf32>
    %47 = vector.broadcast %39 : vector<64x1xf32> to vector<64x32xf32>
    %48 = arith.subf %35, %47 : vector<64x32xf32>
    %cst_17 = arith.constant 9.99999974E-6 : f32
    %49 = vector.broadcast %cst_17 : f32 to vector<64x1xf32>
    %50 = arith.addf %46, %49 : vector<64x1xf32>
    %51 = math.rsqrt %50 : vector<64x1xf32>
    %52 = vector.broadcast %51 : vector<64x1xf32> to vector<64x32xf32>
    %53 = arith.mulf %48, %52 : vector<64x32xf32>
    %54 = vector.broadcast %1 : vector<1x32xf32> to vector<64x32xf32>
    %55 = arith.mulf %53, %54 : vector<64x32xf32>
    %56 = vector.broadcast %2 : vector<1x32xf32> to vector<64x32xf32>
    %57 = arith.addf %55, %56 : vector<64x32xf32>
    %c1_i32_18 = arith.constant 1 : i32
    %58 = tpu.dynamic_rotate %57 by %c1_i32_18 dim 0 : vector<64x32xf32>, i32 -> vector<64x32xf32>
    %59 = arith.select %21, %57, %58 : vector<64x32xi1>, vector<64x32xf32>
    %c63_i32_19 = arith.constant 63 : i32
    %60 = tpu.dynamic_rotate %57 by %c63_i32_19 dim 0 : vector<64x32xf32>, i32 -> vector<64x32xf32>
    %61 = arith.select %23, %57, %60 : vector<64x32xi1>, vector<64x32xf32>
    %62 = arith.addf %59, %57 : vector<64x32xf32>
    %63 = arith.addf %62, %61 : vector<64x32xf32>
    %cst_20 = arith.constant 0.333333343 : f32
    %64 = vector.broadcast %cst_20 : f32 to vector<64x32xf32>
    %65 = arith.mulf %63, %64 : vector<64x32xf32>
    %66 = arith.subf %57, %65 : vector<64x32xf32>
    %c0_21 = arith.constant 0 : index
    %c0_22 = arith.constant 0 : index
    %67 = vector.load %arg4[%c0_21, %c0_22] : memref<32x32xf32, #tpu.memory_space<vmem>>, vector<32x32xf32>
    %cst_23 = arith.constant dense<0.000000e+00> : vector<64x32xf32>
    %68 = tpu.matmul %65, %67, %cst_23 {dimension_numbers = #tpu.dot_dimension_numbers<[1], [0], [0], [1], [0, 0, 1, 1], [], []>} : vector<64x32xf32>, vector<32x32xf32>, vector<64x32xf32> -> vector<64x32xf32>
    %69 = arith.addf %34, %68 : vector<64x32xf32>
    %70 = arith.addf %66, %66 : vector<64x32xf32>
    %cst_24 = arith.constant dense<0.000000e+00> : vector<64xf32>
    %71 = vector.multi_reduction <add>, %70, %cst_24 [1] : vector<64x32xf32> to vector<64xf32>
    %72 = vector.shape_cast %71 : vector<64xf32> to vector<64x1xf32>
    %cst_25 = arith.constant 3.200000e+01 : f32
    %73 = vector.broadcast %cst_25 : f32 to vector<64x1xf32>
    %74 = arith.divf %72, %73 : vector<64x1xf32>
    %75 = vector.broadcast %74 : vector<64x1xf32> to vector<64x32xf32>
    %76 = arith.subf %70, %75 : vector<64x32xf32>
    %77 = arith.mulf %76, %76 : vector<64x32xf32>
    %cst_26 = arith.constant dense<0.000000e+00> : vector<64xf32>
    %78 = vector.multi_reduction <add>, %77, %cst_26 [1] : vector<64x32xf32> to vector<64xf32>
    %79 = vector.shape_cast %78 : vector<64xf32> to vector<64x1xf32>
    %cst_27 = arith.constant 3.200000e+01 : f32
    %80 = vector.broadcast %cst_27 : f32 to vector<64x1xf32>
    %81 = arith.divf %79, %80 : vector<64x1xf32>
    %82 = vector.broadcast %74 : vector<64x1xf32> to vector<64x32xf32>
    %83 = arith.subf %70, %82 : vector<64x32xf32>
    %cst_28 = arith.constant 9.99999974E-6 : f32
    %84 = vector.broadcast %cst_28 : f32 to vector<64x1xf32>
    %85 = arith.addf %81, %84 : vector<64x1xf32>
    %86 = math.rsqrt %85 : vector<64x1xf32>
    %87 = vector.broadcast %86 : vector<64x1xf32> to vector<64x32xf32>
    %88 = arith.mulf %83, %87 : vector<64x32xf32>
    %89 = vector.broadcast %1 : vector<1x32xf32> to vector<64x32xf32>
    %90 = arith.mulf %88, %89 : vector<64x32xf32>
    %91 = vector.broadcast %2 : vector<1x32xf32> to vector<64x32xf32>
    %92 = arith.addf %90, %91 : vector<64x32xf32>
    %c1_i32_29 = arith.constant 1 : i32
    %93 = tpu.dynamic_rotate %92 by %c1_i32_29 dim 0 : vector<64x32xf32>, i32 -> vector<64x32xf32>
    %94 = arith.select %21, %92, %93 : vector<64x32xi1>, vector<64x32xf32>
    %c63_i32_30 = arith.constant 63 : i32
    %95 = tpu.dynamic_rotate %92 by %c63_i32_30 dim 0 : vector<64x32xf32>, i32 -> vector<64x32xf32>
    %96 = arith.select %23, %92, %95 : vector<64x32xi1>, vector<64x32xf32>
    %97 = arith.addf %94, %92 : vector<64x32xf32>
    %98 = arith.addf %97, %96 : vector<64x32xf32>
    %cst_31 = arith.constant 0.333333343 : f32
    %99 = vector.broadcast %cst_31 : f32 to vector<64x32xf32>
    %100 = arith.mulf %98, %99 : vector<64x32xf32>
    %101 = arith.subf %92, %100 : vector<64x32xf32>
    %c0_32 = arith.constant 0 : index
    %c0_33 = arith.constant 0 : index
    %102 = vector.load %arg5[%c0_32, %c0_33] : memref<32x32xf32, #tpu.memory_space<vmem>>, vector<32x32xf32>
    %cst_34 = arith.constant dense<0.000000e+00> : vector<64x32xf32>
    %103 = tpu.matmul %100, %102, %cst_34 {dimension_numbers = #tpu.dot_dimension_numbers<[1], [0], [0], [1], [0, 0, 1, 1], [], []>} : vector<64x32xf32>, vector<32x32xf32>, vector<64x32xf32> -> vector<64x32xf32>
    %104 = arith.addf %69, %103 : vector<64x32xf32>
    %105 = arith.subf %101, %101 : vector<64x32xf32>
    %c0_35 = arith.constant 0 : index
    %c0_36 = arith.constant 0 : index
    %106 = vector.load %arg7[%c0_35, %c0_36] : memref<32x32xf32, #tpu.memory_space<vmem>>, vector<32x32xf32>
    %cst_37 = arith.constant dense<0.000000e+00> : vector<64x32xf32>
    %107 = tpu.matmul %105, %106, %cst_37 {dimension_numbers = #tpu.dot_dimension_numbers<[1], [0], [0], [1], [0, 0, 1, 1], [], []>} : vector<64x32xf32>, vector<32x32xf32>, vector<64x32xf32> -> vector<64x32xf32>
    %cst_38 = arith.constant dense<0.000000e+00> : vector<64xf32>
    %108 = vector.multi_reduction <add>, %101, %cst_38 [1] : vector<64x32xf32> to vector<64xf32>
    %109 = vector.shape_cast %108 : vector<64xf32> to vector<64x1xf32>
    %110 = vector.broadcast %109 : vector<64x1xf32> to vector<64x32xf32>
    %111 = arith.addf %107, %110 : vector<64x32xf32>
    %112 = arith.addf %101, %111 : vector<64x32xf32>
    %cst_39 = arith.constant dense<0.000000e+00> : vector<64xf32>
    %113 = vector.multi_reduction <add>, %112, %cst_39 [1] : vector<64x32xf32> to vector<64xf32>
    %114 = vector.shape_cast %113 : vector<64xf32> to vector<64x1xf32>
    %cst_40 = arith.constant 3.200000e+01 : f32
    %115 = vector.broadcast %cst_40 : f32 to vector<64x1xf32>
    %116 = arith.divf %114, %115 : vector<64x1xf32>
    %117 = vector.broadcast %116 : vector<64x1xf32> to vector<64x32xf32>
    %118 = arith.subf %112, %117 : vector<64x32xf32>
    %119 = arith.mulf %118, %118 : vector<64x32xf32>
    %cst_41 = arith.constant dense<0.000000e+00> : vector<64xf32>
    %120 = vector.multi_reduction <add>, %119, %cst_41 [1] : vector<64x32xf32> to vector<64xf32>
    %121 = vector.shape_cast %120 : vector<64xf32> to vector<64x1xf32>
    %cst_42 = arith.constant 3.200000e+01 : f32
    %122 = vector.broadcast %cst_42 : f32 to vector<64x1xf32>
    %123 = arith.divf %121, %122 : vector<64x1xf32>
    %124 = vector.broadcast %116 : vector<64x1xf32> to vector<64x32xf32>
    %125 = arith.subf %112, %124 : vector<64x32xf32>
    %cst_43 = arith.constant 9.99999974E-6 : f32
    %126 = vector.broadcast %cst_43 : f32 to vector<64x1xf32>
    %127 = arith.addf %123, %126 : vector<64x1xf32>
    %128 = math.rsqrt %127 : vector<64x1xf32>
    %129 = vector.broadcast %128 : vector<64x1xf32> to vector<64x32xf32>
    %130 = arith.mulf %125, %129 : vector<64x32xf32>
    %131 = vector.broadcast %1 : vector<1x32xf32> to vector<64x32xf32>
    %132 = arith.mulf %130, %131 : vector<64x32xf32>
    %133 = vector.broadcast %2 : vector<1x32xf32> to vector<64x32xf32>
    %134 = arith.addf %132, %133 : vector<64x32xf32>
    %c1_i32_44 = arith.constant 1 : i32
    %135 = tpu.dynamic_rotate %134 by %c1_i32_44 dim 0 : vector<64x32xf32>, i32 -> vector<64x32xf32>
    %136 = arith.select %21, %134, %135 : vector<64x32xi1>, vector<64x32xf32>
    %c63_i32_45 = arith.constant 63 : i32
    %137 = tpu.dynamic_rotate %134 by %c63_i32_45 dim 0 : vector<64x32xf32>, i32 -> vector<64x32xf32>
    %138 = arith.select %23, %134, %137 : vector<64x32xi1>, vector<64x32xf32>
    %139 = arith.addf %136, %134 : vector<64x32xf32>
    %140 = arith.addf %139, %138 : vector<64x32xf32>
    %cst_46 = arith.constant 0.333333343 : f32
    %141 = vector.broadcast %cst_46 : f32 to vector<64x32xf32>
    %142 = arith.mulf %140, %141 : vector<64x32xf32>
    %143 = arith.subf %134, %142 : vector<64x32xf32>
    %c0_47 = arith.constant 0 : index
    %c0_48 = arith.constant 0 : index
    %144 = vector.load %arg6[%c0_47, %c0_48] : memref<32x32xf32, #tpu.memory_space<vmem>>, vector<32x32xf32>
    %cst_49 = arith.constant dense<0.000000e+00> : vector<64x32xf32>
    %145 = tpu.matmul %142, %144, %cst_49 {dimension_numbers = #tpu.dot_dimension_numbers<[1], [0], [0], [1], [0, 0, 1, 1], [], []>} : vector<64x32xf32>, vector<32x32xf32>, vector<64x32xf32> -> vector<64x32xf32>
    %146 = arith.addf %104, %145 : vector<64x32xf32>
    %c0_50 = arith.constant 0 : index
    %c0_51 = arith.constant 0 : index
    %147 = vector.load %arg8[%c0_50, %c0_51] : memref<32x64xf32, #tpu.memory_space<vmem>>, vector<32x64xf32>
    %cst_52 = arith.constant dense<0.000000e+00> : vector<64x64xf32>
    %148 = tpu.matmul %143, %147, %cst_52 {dimension_numbers = #tpu.dot_dimension_numbers<[1], [0], [0], [1], [0, 0, 1, 1], [], []>} : vector<64x32xf32>, vector<32x64xf32>, vector<64x64xf32> -> vector<64x64xf32>
    %c0_53 = arith.constant 0 : index
    %c0_54 = arith.constant 0 : index
    %149 = vector.load %arg9[%c0_53, %c0_54] : memref<1x64xf32, #tpu.memory_space<vmem>>, vector<1x64xf32>
    %150 = vector.broadcast %149 : vector<1x64xf32> to vector<64x64xf32>
    %151 = arith.addf %148, %150 : vector<64x64xf32>
    %cst_55 = arith.constant 0.000000e+00 : f32
    %152 = vector.broadcast %cst_55 : f32 to vector<64x64xf32>
    %153 = arith.maximumf %151, %152 : vector<64x64xf32>
    %c0_56 = arith.constant 0 : index
    %c0_57 = arith.constant 0 : index
    %154 = vector.load %arg10[%c0_56, %c0_57] : memref<64x32xf32, #tpu.memory_space<vmem>>, vector<64x32xf32>
    %cst_58 = arith.constant dense<0.000000e+00> : vector<64x32xf32>
    %155 = tpu.matmul %153, %154, %cst_58 {dimension_numbers = #tpu.dot_dimension_numbers<[1], [0], [0], [1], [0, 0, 1, 1], [], []>} : vector<64x64xf32>, vector<64x32xf32>, vector<64x32xf32> -> vector<64x32xf32>
    %c0_59 = arith.constant 0 : index
    %c0_60 = arith.constant 0 : index
    %156 = vector.load %arg11[%c0_59, %c0_60] : memref<1x32xf32, #tpu.memory_space<vmem>>, vector<1x32xf32>
    %157 = vector.broadcast %156 : vector<1x32xf32> to vector<64x32xf32>
    %158 = arith.addf %155, %157 : vector<64x32xf32>
    %159 = arith.addf %143, %158 : vector<64x32xf32>
    %cst_61 = arith.constant dense<0.000000e+00> : vector<64xf32>
    %160 = vector.multi_reduction <add>, %159, %cst_61 [1] : vector<64x32xf32> to vector<64xf32>
    %161 = vector.shape_cast %160 : vector<64xf32> to vector<64x1xf32>
    %cst_62 = arith.constant 3.200000e+01 : f32
    %162 = vector.broadcast %cst_62 : f32 to vector<64x1xf32>
    %163 = arith.divf %161, %162 : vector<64x1xf32>
    %164 = vector.broadcast %163 : vector<64x1xf32> to vector<64x32xf32>
    %165 = arith.subf %159, %164 : vector<64x32xf32>
    %166 = arith.mulf %165, %165 : vector<64x32xf32>
    %cst_63 = arith.constant dense<0.000000e+00> : vector<64xf32>
    %167 = vector.multi_reduction <add>, %166, %cst_63 [1] : vector<64x32xf32> to vector<64xf32>
    %168 = vector.shape_cast %167 : vector<64xf32> to vector<64x1xf32>
    %cst_64 = arith.constant 3.200000e+01 : f32
    %169 = vector.broadcast %cst_64 : f32 to vector<64x1xf32>
    %170 = arith.divf %168, %169 : vector<64x1xf32>
    %171 = vector.broadcast %163 : vector<64x1xf32> to vector<64x32xf32>
    %172 = arith.subf %159, %171 : vector<64x32xf32>
    %cst_65 = arith.constant 9.99999974E-6 : f32
    %173 = vector.broadcast %cst_65 : f32 to vector<64x1xf32>
    %174 = arith.addf %170, %173 : vector<64x1xf32>
    %175 = math.rsqrt %174 : vector<64x1xf32>
    %176 = vector.broadcast %175 : vector<64x1xf32> to vector<64x32xf32>
    %177 = arith.mulf %172, %176 : vector<64x32xf32>
    %178 = vector.broadcast %1 : vector<1x32xf32> to vector<64x32xf32>
    %179 = arith.mulf %177, %178 : vector<64x32xf32>
    %180 = vector.broadcast %2 : vector<1x32xf32> to vector<64x32xf32>
    %181 = arith.addf %179, %180 : vector<64x32xf32>
    %182 = arith.addf %181, %146 : vector<64x32xf32>
    %c0_66 = arith.constant 0 : index
    %c0_67 = arith.constant 0 : index
    %183 = vector.load %arg12[%c0_66, %c0_67] : memref<64x32xf32, #tpu.memory_space<vmem>>, vector<64x32xf32>
    tpu.vector_store %arg12[%c0_66, %c0_67], %182 {strides = array<i32>} : memref<64x32xf32, #tpu.memory_space<vmem>>, vector<64x32xf32>,
    return
  }
}

</mosaic_0001>

<llo_original>
// kernel: tpu_custom_call.1
$region0: #{tpu_custom_call.1}
  #allocation0 [shape = 'u32[]', space=smem, size = 0x4, offset = 0x4, fixed_abs, tag = 'smem constant byte address 0x4 - core index']
  #allocation1 [shape = 'u32[144,128]{1,0:T(1,128)}', space=vmem, size = 0x12000, scoped, tag = 'internal scratch']
  %s0 = inlined_call_operand.vmem [shape: f32[64,32], index: 0, kind: input, shape index: {}]
  %s1 = inlined_call_operand.vmem [shape: f32[1,32], index: 1, kind: input, shape index: {}]
  %s2 = inlined_call_operand.vmem [shape: f32[1,32], index: 2, kind: input, shape index: {}]
  %s3 = inlined_call_operand.vmem [shape: f32[32,32], index: 3, kind: input, shape index: {}]
  %s4 = inlined_call_operand.vmem [shape: f32[32,32], index: 4, kind: input, shape index: {}]
  %s5 = inlined_call_operand.vmem [shape: f32[32,32], index: 5, kind: input, shape index: {}]
  %s6 = inlined_call_operand.vmem [shape: f32[32,32], index: 6, kind: input, shape index: {}]
  %s7 = inlined_call_operand.vmem [shape: f32[32,32], index: 7, kind: input, shape index: {}]
  %s8 = inlined_call_operand.hbm [shape: f32[32,64], index: 8, kind: input, shape index: {}]
  %s9 = inlined_call_operand.vmem [shape: f32[1,64], index: 9, kind: input, shape index: {}]
  %s10 = inlined_call_operand.vmem [shape: f32[64,32], index: 10, kind: input, shape index: {}]
  %s11 = inlined_call_operand.vmem [shape: f32[1,32], index: 11, kind: input, shape index: {}]
  %s12 = inlined_call_operand.vmem [shape: f32[64,32], index: 12, kind: output, shape index: {}]
  %s13 = sld [smem:[#allocation0]]
  $region62: #{tpu_custom_call.1} parent=0
    _
  %s15 = ssub.s32 1, %s13
  %s16 = scalar_select 0, %s15, %s13
  $region1: #{tpu_custom_call.1} parent=0
    #allocation2 [shape = 'u8[16384]{0}', space=vmem, size = 0x4000, scoped, tag = 'input window, operand 8, single buffered']
    #allocation3 [shape = 's32[1]{0}', space=sflag, size = 0x4, scoped, tag = 'scoped memory for tpu_custom_call.1']
    %17 = vsyncpa [#allocation3], 0
    // Predicated region
    $region2: #{tpu_custom_call.1} parent=1 // pred_check
      _
    $region3: #{tpu_custom_call.1} parent=1 // pred_check_branch
      %19 = sbr.rel (0) target = $region5
    $region4: #{tpu_custom_call.1} parent=1 // pred_region
      _
    $region5: #{tpu_custom_call.1} parent=1 // pred_fallthru
      _
    // Predicated region
    $region6: #{tpu_custom_call.1} parent=1 // pred_check
      _
    $region7: #{tpu_custom_call.1} parent=1 // pred_check_branch
      %21 = sbr.rel (0) target = $region9
    $region8: #{tpu_custom_call.1} parent=1 // pred_region
      _
    $region9: #{tpu_custom_call.1} parent=1 // pred_fallthru
      _
    // Predicated region
    $region10: #{tpu_custom_call.1} parent=1 // pred_check
      _
    $region11: #{tpu_custom_call.1} parent=1 // pred_check_branch
      %23 = sbr.rel (0) target = $region13
    $region12: #{tpu_custom_call.1} parent=1 // pred_region
      _
    $region13: #{tpu_custom_call.1} parent=1 // pred_fallthru
      _
    // Predicated region
    $region14: #{tpu_custom_call.1} parent=1 // pred_check
      _
    $region15: #{tpu_custom_call.1} parent=1 // pred_check_branch
      %25 = sbr.rel (0) target = $region17
    $region16: #{tpu_custom_call.1} parent=1 // pred_region
      _
    $region17: #{tpu_custom_call.1} parent=1 // pred_fallthru
      _
    // Predicated region
    $region18: #{tpu_custom_call.1} parent=1 // pred_check
      _
    $region19: #{tpu_custom_call.1} parent=1 // pred_check_branch
      %27 = sbr.rel (0) target = $region21
    $region20: #{tpu_custom_call.1} parent=1 // pred_region
      _
    $region21: #{tpu_custom_call.1} parent=1 // pred_fallthru
      _
    // Predicated region
    $region22: #{tpu_custom_call.1} parent=1 // pred_check
      _
    $region23: #{tpu_custom_call.1} parent=1 // pred_check_branch
      %29 = sbr.rel (0) target = $region25
    $region24: #{tpu_custom_call.1} parent=1 // pred_region
      _
    $region25: #{tpu_custom_call.1} parent=1 // pred_fallthru
      _
    // Predicated region
    $region26: #{tpu_custom_call.1} parent=1 // pred_check
      _
    $region27: #{tpu_custom_call.1} parent=1 // pred_check_branch
      %31 = sbr.rel (0) target = $region29
    $region28: #{tpu_custom_call.1} parent=1 // pred_region
      _
    $region29: #{tpu_custom_call.1} parent=1 // pred_fallthru
      _
    // Predicated region
    $region30: #{tpu_custom_call.1} parent=1 // pred_check
      _
    $region31: #{tpu_custom_call.1} parent=1 // pred_check_branch
      %33 = sbr.rel (0) target = $region33
    $region32: #{tpu_custom_call.1} parent=1 // pred_region
      _
    $region33: #{tpu_custom_call.1} parent=1 // pred_fallthru
      _
    // Predicated region
    $region34: #{tpu_custom_call.1} parent=1 // pred_check
      _
    $region35: #{tpu_custom_call.1} parent=1 // pred_check_branch
      %35 = sbr.rel (0) target = $region37
    $region36: #{tpu_custom_call.1} parent=1 // pred_region
      %s37 = ssub.s32 512, 512
      %38 = vsyncadd [#allocation3], %s37
      %s39 = sshll.u32 [#allocation2], 4
      %s40 = int_to_ptr.vmem [resolvable:$true] %s39
      %45 = dma.hbm_to_vmem [thread:$0]  %s8, 512, %s40, [#allocation3], 128, 128, 8
    $region37: #{tpu_custom_call.1} parent=1 // pred_fallthru
      _
    // Predicated region
    $region38: #{tpu_custom_call.1} parent=1 // pred_check
      _
    $region39: #{tpu_custom_call.1} parent=1 // pred_check_branch
      %47 = sbr.rel (0) target = $region41
    $region40: #{tpu_custom_call.1} parent=1 // pred_region
      _
    $region41: #{tpu_custom_call.1} parent=1 // pred_fallthru
      _
    // Predicated region
    $region42: #{tpu_custom_call.1} parent=1 // pred_check
      _
    $region43: #{tpu_custom_call.1} parent=1 // pred_check_branch
      %49 = sbr.rel (0) target = $region45
    $region44: #{tpu_custom_call.1} parent=1 // pred_region
      _
    $region45: #{tpu_custom_call.1} parent=1 // pred_fallthru
      _
    // Predicated region
    $region46: #{tpu_custom_call.1} parent=1 // pred_check
      _
    $region47: #{tpu_custom_call.1} parent=1 // pred_check_branch
      %51 = sbr.rel (0) target = $region49
    $region48: #{tpu_custom_call.1} parent=1 // pred_region
      _
    $region49: #{tpu_custom_call.1} parent=1 // pred_fallthru
      _
    // Predicated region
    $region50: #{tpu_custom_call.1} parent=1 // pred_check
      _
    $region51: #{tpu_custom_call.1} parent=1 // pred_check_branch
      %53 = sbr.rel (0) target = $region53
    $region52: #{tpu_custom_call.1} parent=1 // pred_region
      %54 = dma.done [#allocation3], 512
    $region53: #{tpu_custom_call.1} parent=1 // pred_fallthru
      _
    %v55 = vld [vmem:[%s0] sm:$0xff]
    %v56 = vld [vmem:[%s0 + $0x8] sm:$0xff]
    %v57 = vld [vmem:[%s0 + $0x10] sm:$0xff]
    %v58 = vld [vmem:[%s0 + $0x18] sm:$0xff]
    %v59 = vld [vmem:[%s0 + $0x20] sm:$0xff]
    %v60 = vld [vmem:[%s0 + $0x28] sm:$0xff]
    %v61 = vld [vmem:[%s0 + $0x30] sm:$0xff]
    %v62 = vld [vmem:[%s0 + $0x38] sm:$0xff]
    %v63 = vld [vmem:[%s1] sm:$0x1]
    %v64 = vld [vmem:[%s2] sm:$0x1]
    %v65 = vlaneseq
    %v66 = vshrl.u32 %v65, 7
    %v67 = vadd.s32 %v66, 8
    %v68 = vadd.s32 %v66, 16
    %v69 = vadd.s32 %v66, 24
    %v70 = vadd.s32 %v66, 32
    %v71 = vadd.s32 %v66, 40
    %v72 = vadd.s32 %v66, 48
    %v73 = vadd.s32 %v66, 56
    %vm74 = vcmp.lt.s32.totalorder %v66, 0
    %v75 = vsub.s32 0, %v66
    %v76 = vsel %vm74, %v75, %v66
    %v77 = vshrl.u32 %v76, 3
    %v78 = vand.u32 %v76, 7
    %v79 = vsub.s32 0, %v78
    %v80 = vsel %vm74, %v79, %v78
    %vm81 = vcmp.lt.s32.totalorder %v67, 0
    %v82 = vsub.s32 0, %v67
    %v83 = vsel %vm81, %v82, %v67
    %v84 = vshrl.u32 %v83, 3
    %v85 = vand.u32 %v83, 7
    %v86 = vsub.s32 0, %v85
    %v87 = vsel %vm81, %v86, %v85
    %vm88 = vcmp.lt.s32.totalorder %v68, 0
    %v89 = vsub.s32 0, %v68
    %v90 = vsel %vm88, %v89, %v68
    %v91 = vshrl.u32 %v90, 3
    %v92 = vand.u32 %v90, 7
    %v93 = vsub.s32 0, %v92
    %v94 = vsel %vm88, %v93, %v92
    %vm95 = vcmp.lt.s32.totalorder %v69, 0
    %v96 = vsub.s32 0, %v69
    %v97 = vsel %vm95, %v96, %v69
    %v98 = vshrl.u32 %v97, 3
    %v99 = vand.u32 %v97, 7
    %v100 = vsub.s32 0, %v99
    %v101 = vsel %vm95, %v100, %v99
    %vm102 = vcmp.lt.s32.totalorder %v70, 0
    %v103 = vsub.s32 0, %v70
    %v104 = vsel %vm102, %v103, %v70
    %v105 = vshrl.u32 %v104, 3
    %v106 = vand.u32 %v104, 7
    %v107 = vsub.s32 0, %v106
    %v108 = vsel %vm102, %v107, %v106
    %vm109 = vcmp.lt.s32.totalorder %v71, 0
    %v110 = vsub.s32 0, %v71
    %v111 = vsel %vm109, %v110, %v71
    %v112 = vshrl.u32 %v111, 3
    %v113 = vand.u32 %v111, 7
    %v114 = vsub.s32 0, %v113
    %v115 = vsel %vm109, %v114, %v113
    %vm116 = vcmp.lt.s32.totalorder %v72, 0
    %v117 = vsub.s32 0, %v72
    %v118 = vsel %vm116, %v117, %v72
    %v119 = vshrl.u32 %v118, 3
    %v120 = vand.u32 %v118, 7
    %v121 = vsub.s32 0, %v120
    %v122 = vsel %vm116, %v121, %v120
    %vm123 = vcmp.lt.s32.totalorder %v73, 0
    %v124 = vsub.s32 0, %v73
    %v125 = vsel %vm123, %v124, %v73
    %v126 = vshrl.u32 %v125, 3
    %v127 = vand.u32 %v125, 7
    %v128 = vsub.s32 0, %v127
    %v129 = vsel %vm123, %v128, %v127
    %vm130 = vcmp.ne.s32.totalorder %v80, 0
    %vm131 = vcmp.ne.s32.totalorder %v87, 0
    %vm132 = vcmp.ne.s32.totalorder %v94, 0
    %vm133 = vcmp.ne.s32.totalorder %v101, 0
    %vm134 = vcmp.ne.s32.totalorder %v108, 0
    %vm135 = vcmp.ne.s32.totalorder %v115, 0
    %vm136 = vcmp.ne.s32.totalorder %v122, 0
    %vm137 = vcmp.ne.s32.totalorder %v129, 0
    %vm138 = vcmp.lt.s32.totalorder %v80, 0
    %vm139 = vcmp.lt.s32.totalorder %v87, 0
    %vm140 = vcmp.lt.s32.totalorder %v94, 0
    %vm141 = vcmp.lt.s32.totalorder %v101, 0
    %vm142 = vcmp.lt.s32.totalorder %v108, 0
    %vm143 = vcmp.lt.s32.totalorder %v115, 0
    %vm144 = vcmp.lt.s32.totalorder %v122, 0
    %vm145 = vcmp.lt.s32.totalorder %v129, 0
    %vm146 = vmand %vm138, %vm130
    %vm147 = vmand %vm139, %vm131
    %vm148 = vmand %vm140, %vm132
    %vm149 = vmand %vm141, %vm133
    %vm150 = vmand %vm142, %vm134
    %vm151 = vmand %vm143, %vm135
    %vm152 = vmand %vm144, %vm136
    %vm153 = vmand %vm145, %vm137
    %v154 = vadd.s32 %v80, 8
    %v155 = vadd.s32 %v87, 8
    %v156 = vadd.s32 %v94, 8
    %v157 = vadd.s32 %v101, 8
    %v158 = vadd.s32 %v108, 8
    %v159 = vadd.s32 %v115, 8
    %v160 = vadd.s32 %v122, 8
    %v161 = vadd.s32 %v129, 8
    %v162 = vsel %vm146, %v154, %v80
    %v163 = vsel %vm147, %v155, %v87
    %v164 = vsel %vm148, %v156, %v94
    %v165 = vsel %vm149, %v157, %v101
    %v166 = vsel %vm150, %v158, %v108
    %v167 = vsel %vm151, %v159, %v115
    %v168 = vsel %vm152, %v160, %v122
    %v169 = vsel %vm153, %v161, %v129
    %vm170 = vcmp.eq.s32.totalorder %v162, 0
    %vm171 = vcmp.eq.s32.totalorder %v163, 0
    %vm172 = vcmp.eq.s32.totalorder %v164, 0
    %vm173 = vcmp.eq.s32.totalorder %v165, 0
    %vm174 = vcmp.eq.s32.totalorder %v166, 0
    %vm175 = vcmp.eq.s32.totalorder %v167, 0
    %vm176 = vcmp.eq.s32.totalorder %v168, 0
    %vm177 = vcmp.eq.s32.totalorder %v169, 0
    %vm178 = vcmp.eq.s32.totalorder %v162, 7
    %vm179 = vcmp.eq.s32.totalorder %v163, 7
    %vm180 = vcmp.eq.s32.totalorder %v164, 7
    %vm181 = vcmp.eq.s32.totalorder %v165, 7
    %vm182 = vcmp.eq.s32.totalorder %v166, 7
    %vm183 = vcmp.eq.s32.totalorder %v167, 7
    %vm184 = vcmp.eq.s32.totalorder %v168, 7
    %vm185 = vcmp.eq.s32.totalorder %v169, 7
    %v186 = vrot.slane %v55, 7
    %v187 = vrot.slane %v56, 7
    %v188 = vrot.slane %v57, 7
    %v189 = vrot.slane %v58, 7
    %v190 = vrot.slane %v59, 7
    %v191 = vrot.slane %v60, 7
    %v192 = vrot.slane %v61, 7
    %v193 = vrot.slane %v62, 7
    %vm194 = vcmp.lt.s32.totalorder %v66, 1
    %v195 = vsel %vm194, %v192, %v193
    %v196 = vsel %vm194, %v191, %v192
    %v197 = vsel %vm194, %v190, %v191
    %v198 = vsel %vm194, %v189, %v190
    %v199 = vsel %vm194, %v188, %v189
    %v200 = vsel %vm194, %v187, %v188
    %v201 = vsel %vm194, %v186, %v187
    %v202 = vsel %vm194, %v193, %v186
    %v203 = vsel %vm170, %v55, %v202
    %v204 = vsel %vm171, %v56, %v201
    %v205 = vsel %vm172, %v57, %v200
    %v206 = vsel %vm173, %v58, %v199
    %v207 = vsel %vm174, %v59, %v198
    %v208 = vsel %vm175, %v60, %v197
    %v209 = vsel %vm176, %v61, %v196
    %v210 = vsel %vm177, %v62, %v195
    %v211 = vrot.slane %v55, 1
    %v212 = vrot.slane %v56, 1
    %v213 = vrot.slane %v57, 1
    %v214 = vrot.slane %v58, 1
    %v215 = vrot.slane %v59, 1
    %v216 = vrot.slane %v60, 1
    %v217 = vrot.slane %v61, 1
    %v218 = vrot.slane %v62, 1
    %vm219 = vcmp.lt.s32.totalorder %v66, 7
    %v220 = vsel %vm219, %v217, %v218
    %v221 = vsel %vm219, %v216, %v217
    %v222 = vsel %vm219, %v215, %v216
    %v223 = vsel %vm219, %v214, %v215
    %v224 = vsel %vm219, %v213, %v214
    %v225 = vsel %vm219, %v212, %v213
    %v226 = vsel %vm219, %v211, %v212
    %v227 = vsel %vm219, %v218, %v211
    %v228 = vsel %vm178, %v55, %v226
    %v229 = vsel %vm179, %v56, %v225
    %v230 = vsel %vm180, %v57, %v224
    %v231 = vsel %vm181, %v58, %v223
    %v232 = vsel %vm182, %v59, %v222
    %v233 = vsel %vm183, %v60, %v221
    %v234 = vsel %vm184, %v61, %v220
    %v235 = vsel %vm185, %v62, %v227
    %v236 = vadd.f32 %v203, %v55
    %v237 = vadd.f32 %v204, %v56
    %v238 = vadd.f32 %v205, %v57
    %v239 = vadd.f32 %v206, %v58
    %v240 = vadd.f32 %v207, %v59
    %v241 = vadd.f32 %v208, %v60
    %v242 = vadd.f32 %v209, %v61
    %v243 = vadd.f32 %v210, %v62
    %v244 = vadd.f32 %v236, %v228
    %v245 = vadd.f32 %v237, %v229
    %v246 = vadd.f32 %v238, %v230
    %v247 = vadd.f32 %v239, %v231
    %v248 = vadd.f32 %v240, %v232
    %v249 = vadd.f32 %v241, %v233
    %v250 = vadd.f32 %v242, %v234
    %v251 = vadd.f32 %v243, %v235
    %v252 = vmul.f32 %v244, 0.33333334
    %v253 = vmul.f32 %v245, 0.33333334
    %v254 = vmul.f32 %v246, 0.33333334
    %v255 = vmul.f32 %v247, 0.33333334
    %v256 = vmul.f32 %v248, 0.33333334
    %v257 = vmul.f32 %v249, 0.33333334
    %v258 = vmul.f32 %v250, 0.33333334
    %v259 = vmul.f32 %v251, 0.33333334
    %v260 = vsub.f32 %v55, %v252
    %v261 = vsub.f32 %v56, %v253
    %v262 = vsub.f32 %v57, %v254
    %v263 = vsub.f32 %v58, %v255
    %v264 = vsub.f32 %v59, %v256
    %v265 = vsub.f32 %v60, %v257
    %v266 = vsub.f32 %v61, %v258
    %v267 = vsub.f32 %v62, %v259
    %v268 = vld [vmem:[%s3] sm:$0xff]
    %v269 = vld [vmem:[%s3 + $0x8] sm:$0xff]
    %v270 = vld [vmem:[%s3 + $0x10] sm:$0xff]
    %v271 = vld [vmem:[%s3 + $0x18] sm:$0xff]
    %v272 = vadd.f32 %v260, %v260
    %v273 = vadd.f32 %v261, %v261
    %v274 = vadd.f32 %v262, %v262
    %v275 = vadd.f32 %v263, %v263
    %v276 = vadd.f32 %v264, %v264
    %v277 = vadd.f32 %v265, %v265
    %v278 = vadd.f32 %v266, %v266
    %v279 = vadd.f32 %v267, %v267
    %vm280 = vcmask 261120
    %v281 = vsel %vm280, %v272, 0.0
    %282 = vadd.xlane.f32.xlu0 %v281
    %v283 = vpop.xlane.xlu0 %282
    %v284 = vsel %vm280, %v273, 0.0
    %285 = vadd.xlane.f32.xlu0 %v284
    %v286 = vpop.xlane.xlu0 %285
    %v287 = vsel %vm280, %v274, 0.0
    %288 = vadd.xlane.f32.xlu0 %v287
    %v289 = vpop.xlane.xlu0 %288
    %v290 = vsel %vm280, %v275, 0.0
    %291 = vadd.xlane.f32.xlu0 %v290
    %v292 = vpop.xlane.xlu0 %291
    %v293 = vsel %vm280, %v276, 0.0
    %294 = vadd.xlane.f32.xlu0 %v293
    %v295 = vpop.xlane.xlu0 %294
    %v296 = vsel %vm280, %v277, 0.0
    %297 = vadd.xlane.f32.xlu0 %v296
    %v298 = vpop.xlane.xlu0 %297
    %v299 = vsel %vm280, %v278, 0.0
    %300 = vadd.xlane.f32.xlu0 %v299
    %v301 = vpop.xlane.xlu0 %300
    %v302 = vsel %vm280, %v279, 0.0
    %303 = vadd.xlane.f32.xlu0 %v302
    %v304 = vpop.xlane.xlu0 %303
    %v305 = vrcp.pop 32.0
    %v306 = vmul.f32 %v283, %v305
    %v307 = vmul.f32 %v286, %v305
    %v308 = vmul.f32 %v289, %v305
    %v309 = vmul.f32 %v292, %v305
    %v310 = vmul.f32 %v295, %v305
    %v311 = vmul.f32 %v298, %v305
    %v312 = vmul.f32 %v301, %v305
    %v313 = vmul.f32 %v304, %v305
    %v314 = vsub.f32 %v272, %v306
    %v315 = vsub.f32 %v273, %v307
    %v316 = vsub.f32 %v274, %v308
    %v317 = vsub.f32 %v275, %v309
    %v318 = vsub.f32 %v276, %v310
    %v319 = vsub.f32 %v277, %v311
    %v320 = vsub.f32 %v278, %v312
    %v321 = vsub.f32 %v279, %v313
    %v322 = vmul.f32 %v314, %v314
    %v323 = vmul.f32 %v315, %v315
    %v324 = vmul.f32 %v316, %v316
    %v325 = vmul.f32 %v317, %v317
    %v326 = vmul.f32 %v318, %v318
    %v327 = vmul.f32 %v319, %v319
    %v328 = vmul.f32 %v320, %v320
    %v329 = vmul.f32 %v321, %v321
    %v330 = vsel %vm280, %v322, 0.0
    %331 = vadd.xlane.f32.xlu0 %v330
    %v332 = vpop.xlane.xlu0 %331
    %v333 = vsel %vm280, %v323, 0.0
    %334 = vadd.xlane.f32.xlu0 %v333
    %v335 = vpop.xlane.xlu0 %334
    %v336 = vsel %vm280, %v324, 0.0
    %337 = vadd.xlane.f32.xlu0 %v336
    %v338 = vpop.xlane.xlu0 %337
    %v339 = vsel %vm280, %v325, 0.0
    %340 = vadd.xlane.f32.xlu0 %v339
    %v341 = vpop.xlane.xlu0 %340
    %v342 = vsel %vm280, %v326, 0.0
    %343 = vadd.xlane.f32.xlu0 %v342
    %v344 = vpop.xlane.xlu0 %343
    %v345 = vsel %vm280, %v327, 0.0
    %346 = vadd.xlane.f32.xlu0 %v345
    %v347 = vpop.xlane.xlu0 %346
    %v348 = vsel %vm280, %v328, 0.0
    %349 = vadd.xlane.f32.xlu0 %v348
    %v350 = vpop.xlane.xlu0 %349
    %v351 = vsel %vm280, %v329, 0.0
    %352 = vadd.xlane.f32.xlu0 %v351
    %v353 = vpop.xlane.xlu0 %352
    %v354 = vmul.f32 %v332, %v305
    %v355 = vmul.f32 %v335, %v305
    %v356 = vmul.f32 %v338, %v305
    %v357 = vmul.f32 %v341, %v305
    %v358 = vmul.f32 %v344, %v305
    %v359 = vmul.f32 %v347, %v305
    %v360 = vmul.f32 %v350, %v305
    %v361 = vmul.f32 %v353, %v305
    %v362 = vadd.f32 %v354, 1e-05
    %v363 = vadd.f32 %v355, 1e-05
    %v364 = vadd.f32 %v356, 1e-05
    %v365 = vadd.f32 %v357, 1e-05
    %v366 = vadd.f32 %v358, 1e-05
    %v367 = vadd.f32 %v359, 1e-05
    %v368 = vadd.f32 %v360, 1e-05
    %v369 = vadd.f32 %v361, 1e-05
    %v370 = vrsqrt.pop %v362
    %v371 = vrsqrt.pop %v363
    %v372 = vrsqrt.pop %v364
    %v373 = vrsqrt.pop %v365
    %v374 = vrsqrt.pop %v366
    %v375 = vrsqrt.pop %v367
    %v376 = vrsqrt.pop %v368
    %v377 = vrsqrt.pop %v369
    %v378 = vmul.f32 %v314, %v370
    %v379 = vmul.f32 %v315, %v371
    %v380 = vmul.f32 %v316, %v372
    %v381 = vmul.f32 %v317, %v373
    %v382 = vmul.f32 %v318, %v374
    %v383 = vmul.f32 %v319, %v375
    %v384 = vmul.f32 %v320, %v376
    %v385 = vmul.f32 %v321, %v377
    %v387 = vlaneseq
    %v388 = vshrl.u32 %v387, 7
    %v389 = vsub.s32 0, %v388
    %v390 = vrot.slane %v63, %v389
    %v392 = vmul.f32 %v378, %v390
    %v393 = vmul.f32 %v379, %v390
    %v394 = vmul.f32 %v380, %v390
    %v395 = vmul.f32 %v381, %v390
    %v396 = vmul.f32 %v382, %v390
    %v397 = vmul.f32 %v383, %v390
    %v398 = vmul.f32 %v384, %v390
    %v399 = vmul.f32 %v385, %v390
    %v401 = vlaneseq
    %v402 = vshrl.u32 %v401, 7
    %v403 = vsub.s32 0, %v402
    %v404 = vrot.slane %v64, %v403
    %v406 = vadd.f32 %v392, %v404
    %v407 = vadd.f32 %v393, %v404
    %v408 = vadd.f32 %v394, %v404
    %v409 = vadd.f32 %v395, %v404
    %v410 = vadd.f32 %v396, %v404
    %v411 = vadd.f32 %v397, %v404
    %v412 = vadd.f32 %v398, %v404
    %v413 = vadd.f32 %v399, %v404
    %v414 = vrot.slane %v406, 7
    %v415 = vrot.slane %v407, 7
    %v416 = vrot.slane %v408, 7
    %v417 = vrot.slane %v409, 7
    %v418 = vrot.slane %v410, 7
    %v419 = vrot.slane %v411, 7
    %v420 = vrot.slane %v412, 7
    %v421 = vrot.slane %v413, 7
    %v422 = vsel %vm194, %v420, %v421
    %v423 = vsel %vm194, %v419, %v420
    %v424 = vsel %vm194, %v418, %v419
    %v425 = vsel %vm194, %v417, %v418
    %v426 = vsel %vm194, %v416, %v417
    %v427 = vsel %vm194, %v415, %v416
    %v428 = vsel %vm194, %v414, %v415
    %v429 = vsel %vm194, %v421, %v414
    %v430 = vsel %vm170, %v406, %v429
    %v431 = vsel %vm171, %v407, %v428
    %v432 = vsel %vm172, %v408, %v427
    %v433 = vsel %vm173, %v409, %v426
    %v434 = vsel %vm174, %v410, %v425
    %v435 = vsel %vm175, %v411, %v424
    %v436 = vsel %vm176, %v412, %v423
    %v437 = vsel %vm177, %v413, %v422
    %v438 = vrot.slane %v406, 1
    %v439 = vrot.slane %v407, 1
    %v440 = vrot.slane %v408, 1
    %v441 = vrot.slane %v409, 1
    %v442 = vrot.slane %v410, 1
    %v443 = vrot.slane %v411, 1
    %v444 = vrot.slane %v412, 1
    %v445 = vrot.slane %v413, 1
    %v446 = vsel %vm219, %v444, %v445
    %v447 = vsel %vm219, %v443, %v444
    %v448 = vsel %vm219, %v442, %v443
    %v449 = vsel %vm219, %v441, %v442
    %v450 = vsel %vm219, %v440, %v441
    %v451 = vsel %vm219, %v439, %v440
    %v452 = vsel %vm219, %v438, %v439
    %v453 = vsel %vm219, %v445, %v438
    %v454 = vsel %vm178, %v406, %v452
    %v455 = vsel %vm179, %v407, %v451
    %v456 = vsel %vm180, %v408, %v450
    %v457 = vsel %vm181, %v409, %v449
    %v458 = vsel %vm182, %v410, %v448
    %v459 = vsel %vm183, %v411, %v447
    %v460 = vsel %vm184, %v412, %v446
    %v461 = vsel %vm185, %v413, %v453
    %v462 = vadd.f32 %v430, %v406
    %v463 = vadd.f32 %v431, %v407
    %v464 = vadd.f32 %v432, %v408
    %v465 = vadd.f32 %v433, %v409
    %v466 = vadd.f32 %v434, %v410
    %v467 = vadd.f32 %v435, %v411
    %v468 = vadd.f32 %v436, %v412
    %v469 = vadd.f32 %v437, %v413
    %v470 = vadd.f32 %v462, %v454
    %v471 = vadd.f32 %v463, %v455
    %v472 = vadd.f32 %v464, %v456
    %v473 = vadd.f32 %v465, %v457
    %v474 = vadd.f32 %v466, %v458
    %v475 = vadd.f32 %v467, %v459
    %v476 = vadd.f32 %v468, %v460
    %v477 = vadd.f32 %v469, %v461
    %v478 = vmul.f32 %v470, 0.33333334
    %v479 = vmul.f32 %v471, 0.33333334
    %v480 = vmul.f32 %v472, 0.33333334
    %v481 = vmul.f32 %v473, 0.33333334
    %v482 = vmul.f32 %v474, 0.33333334
    %v483 = vmul.f32 %v475, 0.33333334
    %v484 = vmul.f32 %v476, 0.33333334
    %v485 = vmul.f32 %v477, 0.33333334
    %v486 = vsub.f32 %v406, %v478
    %v487 = vsub.f32 %v407, %v479
    %v488 = vsub.f32 %v408, %v480
    %v489 = vsub.f32 %v409, %v481
    %v490 = vsub.f32 %v410, %v482
    %v491 = vsub.f32 %v411, %v483
    %v492 = vsub.f32 %v412, %v484
    %v493 = vsub.f32 %v413, %v485
    %v494 = vld [vmem:[%s4] sm:$0xff]
    %v495 = vld [vmem:[%s4 + $0x8] sm:$0xff]
    %v496 = vld [vmem:[%s4 + $0x10] sm:$0xff]
    %v497 = vld [vmem:[%s4 + $0x18] sm:$0xff]
    %v499 = vsel %vm280, %v478, 0
    %v502 = vsel %vm280, %v479, 0
    %v505 = vsel %vm280, %v480, 0
    %v508 = vsel %vm280, %v481, 0
    %v511 = vsel %vm280, %v482, 0
    %v514 = vsel %vm280, %v483, 0
    %v517 = vsel %vm280, %v484, 0
    %v520 = vsel %vm280, %v485, 0
    %522 = vmatprep.subr.mxu0 0.0
    %523 = vmatpush1.msra.mxu0 %v494
    %524 = vmatprep.subr.mxu0 0.0
    %525 = vmatpush1.msra.mxu0 %v495
    %526 = vmatprep.subr.mxu0 0.0
    %527 = vmatpush1.msra.mxu0 %v496
    %528 = vmatprep.subr.mxu0 0.0
    %529 = vmatpush1.msra.mxu0 %v497
    %530 = vmatprep.subr.mxu0 0.0
    %531 = vmatpush1.msra.mxu0 0.0
    %532 = vmatprep.subr.mxu0 0.0
    %533 = vmatpush1.msra.mxu0 0.0
    %534 = vmatprep.subr.mxu0 0.0
    %535 = vmatpush1.msra.mxu0 0.0
    %536 = vmatprep.subr.mxu0 0.0
    %537 = vmatpush1.msra.mxu0 0.0
    %538 = vmatprep.subr.mxu0 0.0
    %539 = vmatpush1.msra.mxu0 0.0
    %540 = vmatprep.subr.mxu0 0.0
    %541 = vmatpush1.msra.mxu0 0.0
    %542 = vmatprep.subr.mxu0 0.0
    %543 = vmatpush1.msra.mxu0 0.0
    %544 = vmatprep.subr.mxu0 0.0
    %545 = vmatpush1.msra.mxu0 0.0
    %546 = vmatprep.subr.mxu0 0.0
    %547 = vmatpush1.msra.mxu0 0.0
    %548 = vmatprep.subr.mxu0 0.0
    %549 = vmatpush1.msra.mxu0 0.0
    %550 = vmatprep.subr.mxu0 0.0
    %551 = vmatpush1.msra.mxu0 0.0
    %552 = vmatprep.subr.mxu0 0.0
    %553 = vmatpush1.msra.mxu0 0.0
    %554 = vmatprep.subr.mxu0 0.0
    %555 = vmatpush1.msra.mxu0 0.0
    %556 = vmatprep.subr.mxu0 0.0
    %557 = vmatpush1.msra.mxu0 0.0
    %558 = vmatprep.subr.mxu0 0.0
    %559 = vmatpush1.msra.mxu0 0.0
    %560 = vmatprep.subr.mxu0 0.0
    %561 = vmatpush1.msra.mxu0 0.0
    %562 = vmatprep.subr.mxu0 0.0
    %563 = vmatpush1.msra.mxu0 0.0
    %564 = vmatprep.subr.mxu0 0.0
    %565 = vmatpush1.msra.mxu0 0.0
    %566 = vmatprep.subr.mxu0 0.0
    %567 = vmatpush1.msra.mxu0 0.0
    %568 = vmatprep.subr.mxu0 0.0
    %569 = vmatpush1.msra.mxu0 0.0
    %570 = vmatprep.subr.mxu0 0.0
    %571 = vmatpush1.msra.mxu0 0.0
    %572 = vmatprep.subr.mxu0 0.0
    %573 = vmatpush1.msra.mxu0 0.0
    %574 = vmatprep.subr.mxu0 0.0
    %575 = vmatpush1.msra.mxu0 0.0
    %576 = vmatprep.subr.mxu0 0.0
    %577 = vmatpush1.msra.mxu0 0.0
    %578 = vmatprep.subr.mxu0 0.0
    %579 = vmatpush1.msra.mxu0 0.0
    %580 = vmatprep.subr.mxu0 0.0
    %581 = vmatpush1.msra.mxu0 0.0
    %582 = vmatprep.subr.mxu0 0.0
    %583 = vmatpush1.msra.mxu0 0.0
    %584 = vmatprep.subr.mxu0 0.0
    %585 = vmatpush1.msra.mxu0 0.0
    %586 = vmatprep.mubr.f32.mxu0 0.0
    %587 = vmatmul.mubr.f32.gmra.mrb[0].mxu0 %v499
    %v588 = vpop.f32.mrb[0].mxu0
    %v589 = vadd.f32 0.0, %v588
    %v590 = vpop.f32.mrb[0].mxu0
    %591 = vmatprep.mubr.f32.mxu0 0.0
    %592 = vmatmul.mubr.f32.gmra.mrb[0].mxu0 %v502
    %v593 = vpop.f32.mrb[0].mxu0
    %v594 = vadd.f32 0.0, %v593
    %v595 = vpop.f32.mrb[0].mxu0
    %596 = vmatprep.mubr.f32.mxu0 0.0
    %597 = vmatmul.mubr.f32.gmra.mrb[0].mxu0 %v505
    %v598 = vpop.f32.mrb[0].mxu0
    %v599 = vadd.f32 0.0, %v598
    %v600 = vpop.f32.mrb[0].mxu0
    %601 = vmatprep.mubr.f32.mxu0 0.0
    %602 = vmatmul.mubr.f32.gmra.mrb[0].mxu0 %v508
    %v603 = vpop.f32.mrb[0].mxu0
    %v604 = vadd.f32 0.0, %v603
    %v605 = vpop.f32.mrb[0].mxu0
    %606 = vmatprep.mubr.f32.mxu0 0.0
    %607 = vmatmul.mubr.f32.gmra.mrb[0].mxu0 %v511
    %v608 = vpop.f32.mrb[0].mxu0
    %v609 = vadd.f32 0.0, %v608
    %v610 = vpop.f32.mrb[0].mxu0
    %611 = vmatprep.mubr.f32.mxu0 0.0
    %612 = vmatmul.mubr.f32.gmra.mrb[0].mxu0 %v514
    %v613 = vpop.f32.mrb[0].mxu0
    %v614 = vadd.f32 0.0, %v613
    %v615 = vpop.f32.mrb[0].mxu0
    %616 = vmatprep.mubr.f32.mxu0 0.0
    %617 = vmatmul.mubr.f32.gmra.mrb[0].mxu0 %v517
    %v618 = vpop.f32.mrb[0].mxu0
    %v619 = vadd.f32 0.0, %v618
    %v620 = vpop.f32.mrb[0].mxu0
    %621 = vmatprep.mubr.f32.mxu0 0.0
    %622 = vmatmul.mubr.f32.gmra.mrb[0].mxu0 %v520
    %v623 = vpop.f32.mrb[0].mxu0
    %v624 = vadd.f32 0.0, %v623
    %v625 = vpop.f32.mrb[0].mxu0
    %626 = vdwg.mxu0
    %v628 = vsel %vm280, %v252, 0
    %v631 = vsel %vm280, %v253, 0
    %v634 = vsel %vm280, %v254, 0
    %v637 = vsel %vm280, %v255, 0
    %v640 = vsel %vm280, %v256, 0
    %v643 = vsel %vm280, %v257, 0
    %v646 = vsel %vm280, %v258, 0
    %v649 = vsel %vm280, %v259, 0
    %651 = vmatprep.subr.mxu0 0.0
    %652 = vmatpush1.msra.mxu0 %v268
    %653 = vmatprep.subr.mxu0 0.0
    %654 = vmatpush1.msra.mxu0 %v269
    %655 = vmatprep.subr.mxu0 0.0
    %656 = vmatpush1.msra.mxu0 %v270
    %657 = vmatprep.subr.mxu0 0.0
    %658 = vmatpush1.msra.mxu0 %v271
    %659 = vmatprep.subr.mxu0 0.0
    %660 = vmatpush1.msra.mxu0 0.0
    %661 = vmatprep.subr.mxu0 0.0
    %662 = vmatpush1.msra.mxu0 0.0
    %663 = vmatprep.subr.mxu0 0.0
    %664 = vmatpush1.msra.mxu0 0.0
    %665 = vmatprep.subr.mxu0 0.0
    %666 = vmatpush1.msra.mxu0 0.0
    %667 = vmatprep.subr.mxu0 0.0
    %668 = vmatpush1.msra.mxu0 0.0
    %669 = vmatprep.subr.mxu0 0.0
    %670 = vmatpush1.msra.mxu0 0.0
    %671 = vmatprep.subr.mxu0 0.0
    %672 = vmatpush1.msra.mxu0 0.0
    %673 = vmatprep.subr.mxu0 0.0
    %674 = vmatpush1.msra.mxu0 0.0
    %675 = vmatprep.subr.mxu0 0.0
    %676 = vmatpush1.msra.mxu0 0.0
    %677 = vmatprep.subr.mxu0 0.0
    %678 = vmatpush1.msra.mxu0 0.0
    %679 = vmatprep.subr.mxu0 0.0
    %680 = vmatpush1.msra.mxu0 0.0
    %681 = vmatprep.subr.mxu0 0.0
    %682 = vmatpush1.msra.mxu0 0.0
    %683 = vmatprep.subr.mxu0 0.0
    %684 = vmatpush1.msra.mxu0 0.0
    %685 = vmatprep.subr.mxu0 0.0
    %686 = vmatpush1.msra.mxu0 0.0
    %687 = vmatprep.subr.mxu0 0.0
    %688 = vmatpush1.msra.mxu0 0.0
    %689 = vmatprep.subr.mxu0 0.0
    %690 = vmatpush1.msra.mxu0 0.0
    %691 = vmatprep.subr.mxu0 0.0
    %692 = vmatpush1.msra.mxu0 0.0
    %693 = vmatprep.subr.mxu0 0.0
    %694 = vmatpush1.msra.mxu0 0.0
    %695 = vmatprep.subr.mxu0 0.0
    %696 = vmatpush1.msra.mxu0 0.0
    %697 = vmatprep.subr.mxu0 0.0
    %698 = vmatpush1.msra.mxu0 0.0
    %699 = vmatprep.subr.mxu0 0.0
    %700 = vmatpush1.msra.mxu0 0.0
    %701 = vmatprep.subr.mxu0 0.0
    %702 = vmatpush1.msra.mxu0 0.0
    %703 = vmatprep.subr.mxu0 0.0
    %704 = vmatpush1.msra.mxu0 0.0
    %705 = vmatprep.subr.mxu0 0.0
    %706 = vmatpush1.msra.mxu0 0.0
    %707 = vmatprep.subr.mxu0 0.0
    %708 = vmatpush1.msra.mxu0 0.0
    %709 = vmatprep.subr.mxu0 0.0
    %710 = vmatpush1.msra.mxu0 0.0
    %711 = vmatprep.subr.mxu0 0.0
    %712 = vmatpush1.msra.mxu0 0.0
    %713 = vmatprep.subr.mxu0 0.0
    %714 = vmatpush1.msra.mxu0 0.0
    %715 = vmatprep.mubr.f32.mxu0 0.0
    %716 = vmatmul.mubr.f32.gmra.mrb[0].mxu0 %v628
    %v717 = vpop.f32.mrb[0].mxu0
    %v718 = vadd.f32 %v589, %v717
    %v719 = vpop.f32.mrb[0].mxu0
    %720 = vmatprep.mubr.f32.mxu0 0.0
    %721 = vmatmul.mubr.f32.gmra.mrb[0].mxu0 %v631
    %v722 = vpop.f32.mrb[0].mxu0
    %v723 = vadd.f32 %v594, %v722
    %v724 = vpop.f32.mrb[0].mxu0
    %725 = vmatprep.mubr.f32.mxu0 0.0
    %726 = vmatmul.mubr.f32.gmra.mrb[0].mxu0 %v634
    %v727 = vpop.f32.mrb[0].mxu0
    %v728 = vadd.f32 %v599, %v727
    %v729 = vpop.f32.mrb[0].mxu0
    %730 = vmatprep.mubr.f32.mxu0 0.0
    %731 = vmatmul.mubr.f32.gmra.mrb[0].mxu0 %v637
    %v732 = vpop.f32.mrb[0].mxu0
    %v733 = vadd.f32 %v604, %v732
    %v734 = vpop.f32.mrb[0].mxu0
    %735 = vmatprep.mubr.f32.mxu0 0.0
    %736 = vmatmul.mubr.f32.gmra.mrb[0].mxu0 %v640
    %v737 = vpop.f32.mrb[0].mxu0
    %v738 = vadd.f32 %v609, %v737
    %v739 = vpop.f32.mrb[0].mxu0
    %740 = vmatprep.mubr.f32.mxu0 0.0
    %741 = vmatmul.mubr.f32.gmra.mrb[0].mxu0 %v643
    %v742 = vpop.f32.mrb[0].mxu0
    %v743 = vadd.f32 %v614, %v742
    %v744 = vpop.f32.mrb[0].mxu0
    %745 = vmatprep.mubr.f32.mxu0 0.0
    %746 = vmatmul.mubr.f32.gmra.mrb[0].mxu0 %v646
    %v747 = vpop.f32.mrb[0].mxu0
    %v748 = vadd.f32 %v619, %v747
    %v749 = vpop.f32.mrb[0].mxu0
    %750 = vmatprep.mubr.f32.mxu0 0.0
    %751 = vmatmul.mubr.f32.gmra.mrb[0].mxu0 %v649
    %v752 = vpop.f32.mrb[0].mxu0
    %v753 = vadd.f32 %v624, %v752
    %v754 = vpop.f32.mrb[0].mxu0
    %755 = vdwg.mxu0
    %v756 = vadd.f32 %v486, %v486
    %v757 = vadd.f32 %v487, %v487
    %v758 = vadd.f32 %v488, %v488
    %v759 = vadd.f32 %v489, %v489
    %v760 = vadd.f32 %v490, %v490
    %v761 = vadd.f32 %v491, %v491
    %v762 = vadd.f32 %v492, %v492
    %v763 = vadd.f32 %v493, %v493
    %v764 = vsel %vm280, %v756, 0.0
    %765 = vadd.xlane.f32.xlu0 %v764
    %v766 = vpop.xlane.xlu0 %765
    %v767 = vsel %vm280, %v757, 0.0
    %768 = vadd.xlane.f32.xlu0 %v767
    %v769 = vpop.xlane.xlu0 %768
    %v770 = vsel %vm280, %v758, 0.0
    %771 = vadd.xlane.f32.xlu0 %v770
    %v772 = vpop.xlane.xlu0 %771
    %v773 = vsel %vm280, %v759, 0.0
    %774 = vadd.xlane.f32.xlu0 %v773
    %v775 = vpop.xlane.xlu0 %774
    %v776 = vsel %vm280, %v760, 0.0
    %777 = vadd.xlane.f32.xlu0 %v776
    %v778 = vpop.xlane.xlu0 %777
    %v779 = vsel %vm280, %v761, 0.0
    %780 = vadd.xlane.f32.xlu0 %v779
    %v781 = vpop.xlane.xlu0 %780
    %v782 = vsel %vm280, %v762, 0.0
    %783 = vadd.xlane.f32.xlu0 %v782
    %v784 = vpop.xlane.xlu0 %783
    %v785 = vsel %vm280, %v763, 0.0
    %786 = vadd.xlane.f32.xlu0 %v785
    %v787 = vpop.xlane.xlu0 %786
    %v788 = vmul.f32 %v766, %v305
    %v789 = vmul.f32 %v769, %v305
    %v790 = vmul.f32 %v772, %v305
    %v791 = vmul.f32 %v775, %v305
    %v792 = vmul.f32 %v778, %v305
    %v793 = vmul.f32 %v781, %v305
    %v794 = vmul.f32 %v784, %v305
    %v795 = vmul.f32 %v787, %v305
    %v796 = vsub.f32 %v756, %v788
    %v797 = vsub.f32 %v757, %v789
    %v798 = vsub.f32 %v758, %v790
    %v799 = vsub.f32 %v759, %v791
    %v800 = vsub.f32 %v760, %v792
    %v801 = vsub.f32 %v761, %v793
    %v802 = vsub.f32 %v762, %v794
    %v803 = vsub.f32 %v763, %v795
    %v804 = vmul.f32 %v796, %v796
    %v805 = vmul.f32 %v797, %v797
    %v806 = vmul.f32 %v798, %v798
    %v807 = vmul.f32 %v799, %v799
    %v808 = vmul.f32 %v800, %v800
    %v809 = vmul.f32 %v801, %v801
    %v810 = vmul.f32 %v802, %v802
    %v811 = vmul.f32 %v803, %v803
    %v812 = vsel %vm280, %v804, 0.0
    %813 = vadd.xlane.f32.xlu0 %v812
    %v814 = vpop.xlane.xlu0 %813
    %v815 = vsel %vm280, %v805, 0.0
    %816 = vadd.xlane.f32.xlu0 %v815
    %v817 = vpop.xlane.xlu0 %816
    %v818 = vsel %vm280, %v806, 0.0
    %819 = vadd.xlane.f32.xlu0 %v818
    %v820 = vpop.xlane.xlu0 %819
    %v821 = vsel %vm280, %v807, 0.0
    %822 = vadd.xlane.f32.xlu0 %v821
    %v823 = vpop.xlane.xlu0 %822
    %v824 = vsel %vm280, %v808, 0.0
    %825 = vadd.xlane.f32.xlu0 %v824
    %v826 = vpop.xlane.xlu0 %825
    %v827 = vsel %vm280, %v809, 0.0
    %828 = vadd.xlane.f32.xlu0 %v827
    %v829 = vpop.xlane.xlu0 %828
    %v830 = vsel %vm280, %v810, 0.0
    %831 = vadd.xlane.f32.xlu0 %v830
    %v832 = vpop.xlane.xlu0 %831
    %v833 = vsel %vm280, %v811, 0.0
    %834 = vadd.xlane.f32.xlu0 %v833
    %v835 = vpop.xlane.xlu0 %834
    %v836 = vmul.f32 %v814, %v305
    %v837 = vmul.f32 %v817, %v305
    %v838 = vmul.f32 %v820, %v305
    %v839 = vmul.f32 %v823, %v305
    %v840 = vmul.f32 %v826, %v305
    %v841 = vmul.f32 %v829, %v305
    %v842 = vmul.f32 %v832, %v305
    %v843 = vmul.f32 %v835, %v305
    %v844 = vadd.f32 %v836, 1e-05
    %v845 = vadd.f32 %v837, 1e-05
    %v846 = vadd.f32 %v838, 1e-05
    %v847 = vadd.f32 %v839, 1e-05
    %v848 = vadd.f32 %v840, 1e-05
    %v849 = vadd.f32 %v841, 1e-05
    %v850 = vadd.f32 %v842, 1e-05
    %v851 = vadd.f32 %v843, 1e-05
    %v852 = vrsqrt.pop %v844
    %v853 = vrsqrt.pop %v845
    %v854 = vrsqrt.pop %v846
    %v855 = vrsqrt.pop %v847
    %v856 = vrsqrt.pop %v848
    %v857 = vrsqrt.pop %v849
    %v858 = vrsqrt.pop %v850
    %v859 = vrsqrt.pop %v851
    %v860 = vmul.f32 %v796, %v852
    %v861 = vmul.f32 %v797, %v853
    %v862 = vmul.f32 %v798, %v854
    %v863 = vmul.f32 %v799, %v855
    %v864 = vmul.f32 %v800, %v856
    %v865 = vmul.f32 %v801, %v857
    %v866 = vmul.f32 %v802, %v858
    %v867 = vmul.f32 %v803, %v859
    %v868 = vmul.f32 %v860, %v390
    %v869 = vmul.f32 %v861, %v390
    %v870 = vmul.f32 %v862, %v390
    %v871 = vmul.f32 %v863, %v390
    %v872 = vmul.f32 %v864, %v390
    %v873 = vmul.f32 %v865, %v390
    %v874 = vmul.f32 %v866, %v390
    %v875 = vmul.f32 %v867, %v390
    %v876 = vadd.f32 %v868, %v404
    %v877 = vadd.f32 %v869, %v404
    %v878 = vadd.f32 %v870, %v404
    %v879 = vadd.f32 %v871, %v404
    %v880 = vadd.f32 %v872, %v404
    %v881 = vadd.f32 %v873, %v404
    %v882 = vadd.f32 %v874, %v404
    %v883 = vadd.f32 %v875, %v404
    %v884 = vrot.slane %v876, 7
    %v885 = vrot.slane %v877, 7
    %v886 = vrot.slane %v878, 7
    %v887 = vrot.slane %v879, 7
    %v888 = vrot.slane %v880, 7
    %v889 = vrot.slane %v881, 7
    %v890 = vrot.slane %v882, 7
    %v891 = vrot.slane %v883, 7
    %v892 = vsel %vm194, %v890, %v891
    %v893 = vsel %vm194, %v889, %v890
    %v894 = vsel %vm194, %v888, %v889
    %v895 = vsel %vm194, %v887, %v888
    %v896 = vsel %vm194, %v886, %v887
    %v897 = vsel %vm194, %v885, %v886
    %v898 = vsel %vm194, %v884, %v885
    %v899 = vsel %vm194, %v891, %v884
    %v900 = vsel %vm170, %v876, %v899
    %v901 = vsel %vm171, %v877, %v898
    %v902 = vsel %vm172, %v878, %v897
    %v903 = vsel %vm173, %v879, %v896
    %v904 = vsel %vm174, %v880, %v895
    %v905 = vsel %vm175, %v881, %v894
    %v906 = vsel %vm176, %v882, %v893
    %v907 = vsel %vm177, %v883, %v892
    %v908 = vrot.slane %v876, 1
    %v909 = vrot.slane %v877, 1
    %v910 = vrot.slane %v878, 1
    %v911 = vrot.slane %v879, 1
    %v912 = vrot.slane %v880, 1
    %v913 = vrot.slane %v881, 1
    %v914 = vrot.slane %v882, 1
    %v915 = vrot.slane %v883, 1
    %v916 = vsel %vm219, %v914, %v915
    %v917 = vsel %vm219, %v913, %v914
    %v918 = vsel %vm219, %v912, %v913
    %v919 = vsel %vm219, %v911, %v912
    %v920 = vsel %vm219, %v910, %v911
    %v921 = vsel %vm219, %v909, %v910
    %v922 = vsel %vm219, %v908, %v909
    %v923 = vsel %vm219, %v915, %v908
    %v924 = vsel %vm178, %v876, %v922
    %v925 = vsel %vm179, %v877, %v921
    %v926 = vsel %vm180, %v878, %v920
    %v927 = vsel %vm181, %v879, %v919
    %v928 = vsel %vm182, %v880, %v918
    %v929 = vsel %vm183, %v881, %v917
    %v930 = vsel %vm184, %v882, %v916
    %v931 = vsel %vm185, %v883, %v923
    %v932 = vadd.f32 %v900, %v876
    %v933 = vadd.f32 %v901, %v877
    %v934 = vadd.f32 %v902, %v878
    %v935 = vadd.f32 %v903, %v879
    %v936 = vadd.f32 %v904, %v880
    %v937 = vadd.f32 %v905, %v881
    %v938 = vadd.f32 %v906, %v882
    %v939 = vadd.f32 %v907, %v883
    %v940 = vadd.f32 %v932, %v924
    %v941 = vadd.f32 %v933, %v925
    %v942 = vadd.f32 %v934, %v926
    %v943 = vadd.f32 %v935, %v927
    %v944 = vadd.f32 %v936, %v928
    %v945 = vadd.f32 %v937, %v929
    %v946 = vadd.f32 %v938, %v930
    %v947 = vadd.f32 %v939, %v931
    %v948 = vmul.f32 %v940, 0.33333334
    %v949 = vmul.f32 %v941, 0.33333334
    %v950 = vmul.f32 %v942, 0.33333334
    %v951 = vmul.f32 %v943, 0.33333334
    %v952 = vmul.f32 %v944, 0.33333334
    %v953 = vmul.f32 %v945, 0.33333334
    %v954 = vmul.f32 %v946, 0.33333334
    %v955 = vmul.f32 %v947, 0.33333334
    %v956 = vsub.f32 %v876, %v948
    %v957 = vsub.f32 %v877, %v949
    %v958 = vsub.f32 %v878, %v950
    %v959 = vsub.f32 %v879, %v951
    %v960 = vsub.f32 %v880, %v952
    %v961 = vsub.f32 %v881, %v953
    %v962 = vsub.f32 %v882, %v954
    %v963 = vsub.f32 %v883, %v955
    %v964 = vld [vmem:[%s5] sm:$0xff]
    %v965 = vld [vmem:[%s5 + $0x8] sm:$0xff]
    %v966 = vld [vmem:[%s5 + $0x10] sm:$0xff]
    %v967 = vld [vmem:[%s5 + $0x18] sm:$0xff]
    %v969 = vsel %vm280, %v948, 0
    %v972 = vsel %vm280, %v949, 0
    %v975 = vsel %vm280, %v950, 0
    %v978 = vsel %vm280, %v951, 0
    %v981 = vsel %vm280, %v952, 0
    %v984 = vsel %vm280, %v953, 0
    %v987 = vsel %vm280, %v954, 0
    %v990 = vsel %vm280, %v955, 0
    %992 = vmatprep.subr.mxu0 0.0
    %993 = vmatpush1.msra.mxu0 %v964
    %994 = vmatprep.subr.mxu0 0.0
    %995 = vmatpush1.msra.mxu0 %v965
    %996 = vmatprep.subr.mxu0 0.0
    %997 = vmatpush1.msra.mxu0 %v966
    %998 = vmatprep.subr.mxu0 0.0
    %999 = vmatpush1.msra.mxu0 %v967
    %1000 = vmatprep.subr.mxu0 0.0
    %1001 = vmatpush1.msra.mxu0 0.0
    %1002 = vmatprep.subr.mxu0 0.0
    %1003 = vmatpush1.msra.mxu0 0.0
    %1004 = vmatprep.subr.mxu0 0.0
    %1005 = vmatpush1.msra.mxu0 0.0
    %1006 = vmatprep.subr.mxu0 0.0
    %1007 = vmatpush1.msra.mxu0 0.0
    %1008 = vmatprep.subr.mxu0 0.0
    %1009 = vmatpush1.msra.mxu0 0.0
    %1010 = vmatprep.subr.mxu0 0.0
    %1011 = vmatpush1.msra.mxu0 0.0
    %1012 = vmatprep.subr.mxu0 0.0
    %1013 = vmatpush1.msra.mxu0 0.0
    %1014 = vmatprep.subr.mxu0 0.0
    %1015 = vmatpush1.msra.mxu0 0.0
    %1016 = vmatprep.subr.mxu0 0.0
    %1017 = vmatpush1.msra.mxu0 0.0
    %1018 = vmatprep.subr.mxu0 0.0
    %1019 = vmatpush1.msra.mxu0 0.0
    %1020 = vmatprep.subr.mxu0 0.0
    %1021 = vmatpush1.msra.mxu0 0.0
    %1022 = vmatprep.subr.mxu0 0.0
    %1023 = vmatpush1.msra.mxu0 0.0
    %1024 = vmatprep.subr.mxu0 0.0
    %1025 = vmatpush1.msra.mxu0 0.0
    %1026 = vmatprep.subr.mxu0 0.0
    %1027 = vmatpush1.msra.mxu0 0.0
    %1028 = vmatprep.subr.mxu0 0.0
    %1029 = vmatpush1.msra.mxu0 0.0
    %1030 = vmatprep.subr.mxu0 0.0
    %1031 = vmatpush1.msra.mxu0 0.0
    %1032 = vmatprep.subr.mxu0 0.0
    %1033 = vmatpush1.msra.mxu0 0.0
    %1034 = vmatprep.subr.mxu0 0.0
    %1035 = vmatpush1.msra.mxu0 0.0
    %1036 = vmatprep.subr.mxu0 0.0
    %1037 = vmatpush1.msra.mxu0 0.0
    %1038 = vmatprep.subr.mxu0 0.0
    %1039 = vmatpush1.msra.mxu0 0.0
    %1040 = vmatprep.subr.mxu0 0.0
    %1041 = vmatpush1.msra.mxu0 0.0
    %1042 = vmatprep.subr.mxu0 0.0
    %1043 = vmatpush1.msra.mxu0 0.0
    %1044 = vmatprep.subr.mxu0 0.0
    %1045 = vmatpush1.msra.mxu0 0.0
    %1046 = vmatprep.subr.mxu0 0.0
    %1047 = vmatpush1.msra.mxu0 0.0
    %1048 = vmatprep.subr.mxu0 0.0
    %1049 = vmatpush1.msra.mxu0 0.0
    %1050 = vmatprep.subr.mxu0 0.0
    %1051 = vmatpush1.msra.mxu0 0.0
    %1052 = vmatprep.subr.mxu0 0.0
    %1053 = vmatpush1.msra.mxu0 0.0
    %1054 = vmatprep.subr.mxu0 0.0
    %1055 = vmatpush1.msra.mxu0 0.0
    %1056 = vmatprep.mubr.f32.mxu0 0.0
    %1057 = vmatmul.mubr.f32.gmra.mrb[0].mxu0 %v969
    %v1058 = vpop.f32.mrb[0].mxu0
    %v1059 = vadd.f32 0.0, %v1058
    %v1060 = vpop.f32.mrb[0].mxu0
    %1061 = vmatprep.mubr.f32.mxu0 0.0
    %1062 = vmatmul.mubr.f32.gmra.mrb[0].mxu0 %v972
    %v1063 = vpop.f32.mrb[0].mxu0
    %v1064 = vadd.f32 0.0, %v1063
    %v1065 = vpop.f32.mrb[0].mxu0
    %1066 = vmatprep.mubr.f32.mxu0 0.0
    %1067 = vmatmul.mubr.f32.gmra.mrb[0].mxu0 %v975
    %v1068 = vpop.f32.mrb[0].mxu0
    %v1069 = vadd.f32 0.0, %v1068
    %v1070 = vpop.f32.mrb[0].mxu0
    %1071 = vmatprep.mubr.f32.mxu0 0.0
    %1072 = vmatmul.mubr.f32.gmra.mrb[0].mxu0 %v978
    %v1073 = vpop.f32.mrb[0].mxu0
    %v1074 = vadd.f32 0.0, %v1073
    %v1075 = vpop.f32.mrb[0].mxu0
    %1076 = vmatprep.mubr.f32.mxu0 0.0
    %1077 = vmatmul.mubr.f32.gmra.mrb[0].mxu0 %v981
    %v1078 = vpop.f32.mrb[0].mxu0
    %v1079 = vadd.f32 0.0, %v1078
    %v1080 = vpop.f32.mrb[0].mxu0
    %1081 = vmatprep.mubr.f32.mxu0 0.0
    %1082 = vmatmul.mubr.f32.gmra.mrb[0].mxu0 %v984
    %v1083 = vpop.f32.mrb[0].mxu0
    %v1084 = vadd.f32 0.0, %v1083
    %v1085 = vpop.f32.mrb[0].mxu0
    %1086 = vmatprep.mubr.f32.mxu0 0.0
    %1087 = vmatmul.mubr.f32.gmra.mrb[0].mxu0 %v987
    %v1088 = vpop.f32.mrb[0].mxu0
    %v1089 = vadd.f32 0.0, %v1088
    %v1090 = vpop.f32.mrb[0].mxu0
    %1091 = vmatprep.mubr.f32.mxu0 0.0
    %1092 = vmatmul.mubr.f32.gmra.mrb[0].mxu0 %v990
    %v1093 = vpop.f32.mrb[0].mxu0
    %v1094 = vadd.f32 0.0, %v1093
    %v1095 = vpop.f32.mrb[0].mxu0
    %1096 = vdwg.mxu0
    %v1097 = vadd.f32 %v718, %v1059
    %v1098 = vadd.f32 %v723, %v1064
    %v1099 = vadd.f32 %v728, %v1069
    %v1100 = vadd.f32 %v733, %v1074
    %v1101 = vadd.f32 %v738, %v1079
    %v1102 = vadd.f32 %v743, %v1084
    %v1103 = vadd.f32 %v748, %v1089
    %v1104 = vadd.f32 %v753, %v1094
    %v1105 = vsub.f32 %v956, %v956
    %v1106 = vsub.f32 %v957, %v957
    %v1107 = vsub.f32 %v958, %v958
    %v1108 = vsub.f32 %v959, %v959
    %v1109 = vsub.f32 %v960, %v960
    %v1110 = vsub.f32 %v961, %v961
    %v1111 = vsub.f32 %v962, %v962
    %v1112 = vsub.f32 %v963, %v963
    %v1113 = vld [vmem:[%s7] sm:$0xff]
    %v1114 = vld [vmem:[%s7 + $0x8] sm:$0xff]
    %v1115 = vld [vmem:[%s7 + $0x10] sm:$0xff]
    %v1116 = vld [vmem:[%s7 + $0x18] sm:$0xff]
    %v1117 = vsel %vm280, %v956, 0.0
    %1118 = vadd.xlane.f32.xlu0 %v1117
    %v1119 = vpop.xlane.xlu0 %1118
    %v1120 = vsel %vm280, %v957, 0.0
    %1121 = vadd.xlane.f32.xlu0 %v1120
    %v1122 = vpop.xlane.xlu0 %1121
    %v1123 = vsel %vm280, %v958, 0.0
    %1124 = vadd.xlane.f32.xlu0 %v1123
    %v1125 = vpop.xlane.xlu0 %1124
    %v1126 = vsel %vm280, %v959, 0.0
    %1127 = vadd.xlane.f32.xlu0 %v1126
    %v1128 = vpop.xlane.xlu0 %1127
    %v1129 = vsel %vm280, %v960, 0.0
    %1130 = vadd.xlane.f32.xlu0 %v1129
    %v1131 = vpop.xlane.xlu0 %1130
    %v1132 = vsel %vm280, %v961, 0.0
    %1133 = vadd.xlane.f32.xlu0 %v1132
    %v1134 = vpop.xlane.xlu0 %1133
    %v1135 = vsel %vm280, %v962, 0.0
    %1136 = vadd.xlane.f32.xlu0 %v1135
    %v1137 = vpop.xlane.xlu0 %1136
    %v1138 = vsel %vm280, %v963, 0.0
    %1139 = vadd.xlane.f32.xlu0 %v1138
    %v1140 = vpop.xlane.xlu0 %1139
    %v1142 = vsel %vm280, %v1105, 0
    %v1145 = vsel %vm280, %v1106, 0
    %v1148 = vsel %vm280, %v1107, 0
    %v1151 = vsel %vm280, %v1108, 0
    %v1154 = vsel %vm280, %v1109, 0
    %v1157 = vsel %vm280, %v1110, 0
    %v1160 = vsel %vm280, %v1111, 0
    %v1163 = vsel %vm280, %v1112, 0
    %1165 = vmatprep.subr.mxu0 0.0
    %1166 = vmatpush1.msra.mxu0 %v1113
    %1167 = vmatprep.subr.mxu0 0.0
    %1168 = vmatpush1.msra.mxu0 %v1114
    %1169 = vmatprep.subr.mxu0 0.0
    %1170 = vmatpush1.msra.mxu0 %v1115
    %1171 = vmatprep.subr.mxu0 0.0
    %1172 = vmatpush1.msra.mxu0 %v1116
    %1173 = vmatprep.subr.mxu0 0.0
    %1174 = vmatpush1.msra.mxu0 0.0
    %1175 = vmatprep.subr.mxu0 0.0
    %1176 = vmatpush1.msra.mxu0 0.0
    %1177 = vmatprep.subr.mxu0 0.0
    %1178 = vmatpush1.msra.mxu0 0.0
    %1179 = vmatprep.subr.mxu0 0.0
    %1180 = vmatpush1.msra.mxu0 0.0
    %1181 = vmatprep.subr.mxu0 0.0
    %1182 = vmatpush1.msra.mxu0 0.0
    %1183 = vmatprep.subr.mxu0 0.0
    %1184 = vmatpush1.msra.mxu0 0.0
    %1185 = vmatprep.subr.mxu0 0.0
    %1186 = vmatpush1.msra.mxu0 0.0
    %1187 = vmatprep.subr.mxu0 0.0
    %1188 = vmatpush1.msra.mxu0 0.0
    %1189 = vmatprep.subr.mxu0 0.0
    %1190 = vmatpush1.msra.mxu0 0.0
    %1191 = vmatprep.subr.mxu0 0.0
    %1192 = vmatpush1.msra.mxu0 0.0
    %1193 = vmatprep.subr.mxu0 0.0
    %1194 = vmatpush1.msra.mxu0 0.0
    %1195 = vmatprep.subr.mxu0 0.0
    %1196 = vmatpush1.msra.mxu0 0.0
    %1197 = vmatprep.subr.mxu0 0.0
    %1198 = vmatpush1.msra.mxu0 0.0
    %1199 = vmatprep.subr.mxu0 0.0
    %1200 = vmatpush1.msra.mxu0 0.0
    %1201 = vmatprep.subr.mxu0 0.0
    %1202 = vmatpush1.msra.mxu0 0.0
    %1203 = vmatprep.subr.mxu0 0.0
    %1204 = vmatpush1.msra.mxu0 0.0
    %1205 = vmatprep.subr.mxu0 0.0
    %1206 = vmatpush1.msra.mxu0 0.0
    %1207 = vmatprep.subr.mxu0 0.0
    %1208 = vmatpush1.msra.mxu0 0.0
    %1209 = vmatprep.subr.mxu0 0.0
    %1210 = vmatpush1.msra.mxu0 0.0
    %1211 = vmatprep.subr.mxu0 0.0
    %1212 = vmatpush1.msra.mxu0 0.0
    %1213 = vmatprep.subr.mxu0 0.0
    %1214 = vmatpush1.msra.mxu0 0.0
    %1215 = vmatprep.subr.mxu0 0.0
    %1216 = vmatpush1.msra.mxu0 0.0
    %1217 = vmatprep.subr.mxu0 0.0
    %1218 = vmatpush1.msra.mxu0 0.0
    %1219 = vmatprep.subr.mxu0 0.0
    %1220 = vmatpush1.msra.mxu0 0.0
    %1221 = vmatprep.subr.mxu0 0.0
    %1222 = vmatpush1.msra.mxu0 0.0
    %1223 = vmatprep.subr.mxu0 0.0
    %1224 = vmatpush1.msra.mxu0 0.0
    %1225 = vmatprep.subr.mxu0 0.0
    %1226 = vmatpush1.msra.mxu0 0.0
    %1227 = vmatprep.subr.mxu0 0.0
    %1228 = vmatpush1.msra.mxu0 0.0
    %1229 = vmatprep.mubr.f32.mxu0 0.0
    %1230 = vmatmul.mubr.f32.gmra.mrb[0].mxu0 %v1142
    %v1231 = vpop.f32.mrb[0].mxu0
    %v1232 = vadd.f32 %v1119, %v1231
    %v1233 = vpop.f32.mrb[0].mxu0
    %1234 = vmatprep.mubr.f32.mxu0 0.0
    %1235 = vmatmul.mubr.f32.gmra.mrb[0].mxu0 %v1145
    %v1236 = vpop.f32.mrb[0].mxu0
    %v1237 = vadd.f32 %v1122, %v1236
    %v1238 = vpop.f32.mrb[0].mxu0
    %1239 = vmatprep.mubr.f32.mxu0 0.0
    %1240 = vmatmul.mubr.f32.gmra.mrb[0].mxu0 %v1148
    %v1241 = vpop.f32.mrb[0].mxu0
    %v1242 = vadd.f32 %v1125, %v1241
    %v1243 = vpop.f32.mrb[0].mxu0
    %1244 = vmatprep.mubr.f32.mxu0 0.0
    %1245 = vmatmul.mubr.f32.gmra.mrb[0].mxu0 %v1151
    %v1246 = vpop.f32.mrb[0].mxu0
    %v1247 = vadd.f32 %v1128, %v1246
    %v1248 = vpop.f32.mrb[0].mxu0
    %1249 = vmatprep.mubr.f32.mxu0 0.0
    %1250 = vmatmul.mubr.f32.gmra.mrb[0].mxu0 %v1154
    %v1251 = vpop.f32.mrb[0].mxu0
    %v1252 = vadd.f32 %v1131, %v1251
    %v1253 = vpop.f32.mrb[0].mxu0
    %1254 = vmatprep.mubr.f32.mxu0 0.0
    %1255 = vmatmul.mubr.f32.gmra.mrb[0].mxu0 %v1157
    %v1256 = vpop.f32.mrb[0].mxu0
    %v1257 = vadd.f32 %v1134, %v1256
    %v1258 = vpop.f32.mrb[0].mxu0
    %1259 = vmatprep.mubr.f32.mxu0 0.0
    %1260 = vmatmul.mubr.f32.gmra.mrb[0].mxu0 %v1160
    %v1261 = vpop.f32.mrb[0].mxu0
    %v1262 = vadd.f32 %v1137, %v1261
    %v1263 = vpop.f32.mrb[0].mxu0
    %1264 = vmatprep.mubr.f32.mxu0 0.0
    %1265 = vmatmul.mubr.f32.gmra.mrb[0].mxu0 %v1163
    %v1266 = vpop.f32.mrb[0].mxu0
    %v1267 = vadd.f32 %v1140, %v1266
    %v1268 = vpop.f32.mrb[0].mxu0
    %1269 = vdwg.mxu0
    %v1270 = vadd.f32 %v956, %v1232
    %v1271 = vadd.f32 %v957, %v1237
    %v1272 = vadd.f32 %v958, %v1242
    %v1273 = vadd.f32 %v959, %v1247
    %v1274 = vadd.f32 %v960, %v1252
    %v1275 = vadd.f32 %v961, %v1257
    %v1276 = vadd.f32 %v962, %v1262
    %v1277 = vadd.f32 %v963, %v1267
    %v1278 = vsel %vm280, %v1270, 0.0
    %1279 = vadd.xlane.f32.xlu0 %v1278
    %v1280 = vpop.xlane.xlu0 %1279
    %v1281 = vsel %vm280, %v1271, 0.0
    %1282 = vadd.xlane.f32.xlu0 %v1281
    %v1283 = vpop.xlane.xlu0 %1282
    %v1284 = vsel %vm280, %v1272, 0.0
    %1285 = vadd.xlane.f32.xlu0 %v1284
    %v1286 = vpop.xlane.xlu0 %1285
    %v1287 = vsel %vm280, %v1273, 0.0
    %1288 = vadd.xlane.f32.xlu0 %v1287
    %v1289 = vpop.xlane.xlu0 %1288
    %v1290 = vsel %vm280, %v1274, 0.0
    %1291 = vadd.xlane.f32.xlu0 %v1290
    %v1292 = vpop.xlane.xlu0 %1291
    %v1293 = vsel %vm280, %v1275, 0.0
    %1294 = vadd.xlane.f32.xlu0 %v1293
    %v1295 = vpop.xlane.xlu0 %1294
    %v1296 = vsel %vm280, %v1276, 0.0
    %1297 = vadd.xlane.f32.xlu0 %v1296
    %v1298 = vpop.xlane.xlu0 %1297
    %v1299 = vsel %vm280, %v1277, 0.0
    %1300 = vadd.xlane.f32.xlu0 %v1299
    %v1301 = vpop.xlane.xlu0 %1300
    %v1302 = vmul.f32 %v1280, %v305
    %v1303 = vmul.f32 %v1283, %v305
    %v1304 = vmul.f32 %v1286, %v305
    %v1305 = vmul.f32 %v1289, %v305
    %v1306 = vmul.f32 %v1292, %v305
    %v1307 = vmul.f32 %v1295, %v305
    %v1308 = vmul.f32 %v1298, %v305
    %v1309 = vmul.f32 %v1301, %v305
    %v1310 = vsub.f32 %v1270, %v1302
    %v1311 = vsub.f32 %v1271, %v1303
    %v1312 = vsub.f32 %v1272, %v1304
    %v1313 = vsub.f32 %v1273, %v1305
    %v1314 = vsub.f32 %v1274, %v1306
    %v1315 = vsub.f32 %v1275, %v1307
    %v1316 = vsub.f32 %v1276, %v1308
    %v1317 = vsub.f32 %v1277, %v1309
    %v1318 = vmul.f32 %v1310, %v1310
    %v1319 = vmul.f32 %v1311, %v1311
    %v1320 = vmul.f32 %v1312, %v1312
    %v1321 = vmul.f32 %v1313, %v1313
    %v1322 = vmul.f32 %v1314, %v1314
    %v1323 = vmul.f32 %v1315, %v1315
    %v1324 = vmul.f32 %v1316, %v1316
    %v1325 = vmul.f32 %v1317, %v1317
    %v1326 = vsel %vm280, %v1318, 0.0
    %1327 = vadd.xlane.f32.xlu0 %v1326
    %v1328 = vpop.xlane.xlu0 %1327
    %v1329 = vsel %vm280, %v1319, 0.0
    %1330 = vadd.xlane.f32.xlu0 %v1329
    %v1331 = vpop.xlane.xlu0 %1330
    %v1332 = vsel %vm280, %v1320, 0.0
    %1333 = vadd.xlane.f32.xlu0 %v1332
    %v1334 = vpop.xlane.xlu0 %1333
    %v1335 = vsel %vm280, %v1321, 0.0
    %1336 = vadd.xlane.f32.xlu0 %v1335
    %v1337 = vpop.xlane.xlu0 %1336
    %v1338 = vsel %vm280, %v1322, 0.0
    %1339 = vadd.xlane.f32.xlu0 %v1338
    %v1340 = vpop.xlane.xlu0 %1339
    %v1341 = vsel %vm280, %v1323, 0.0
    %1342 = vadd.xlane.f32.xlu0 %v1341
    %v1343 = vpop.xlane.xlu0 %1342
    %v1344 = vsel %vm280, %v1324, 0.0
    %1345 = vadd.xlane.f32.xlu0 %v1344
    %v1346 = vpop.xlane.xlu0 %1345
    %v1347 = vsel %vm280, %v1325, 0.0
    %1348 = vadd.xlane.f32.xlu0 %v1347
    %v1349 = vpop.xlane.xlu0 %1348
    %v1350 = vmul.f32 %v1328, %v305
    %v1351 = vmul.f32 %v1331, %v305
    %v1352 = vmul.f32 %v1334, %v305
    %v1353 = vmul.f32 %v1337, %v305
    %v1354 = vmul.f32 %v1340, %v305
    %v1355 = vmul.f32 %v1343, %v305
    %v1356 = vmul.f32 %v1346, %v305
    %v1357 = vmul.f32 %v1349, %v305
    %v1358 = vadd.f32 %v1350, 1e-05
    %v1359 = vadd.f32 %v1351, 1e-05
    %v1360 = vadd.f32 %v1352, 1e-05
    %v1361 = vadd.f32 %v1353, 1e-05
    %v1362 = vadd.f32 %v1354, 1e-05
    %v1363 = vadd.f32 %v1355, 1e-05
    %v1364 = vadd.f32 %v1356, 1e-05
    %v1365 = vadd.f32 %v1357, 1e-05
    %v1366 = vrsqrt.pop %v1358
    %v1367 = vrsqrt.pop %v1359
    %v1368 = vrsqrt.pop %v1360
    %v1369 = vrsqrt.pop %v1361
    %v1370 = vrsqrt.pop %v1362
    %v1371 = vrsqrt.pop %v1363
    %v1372 = vrsqrt.pop %v1364
    %v1373 = vrsqrt.pop %v1365
    %v1374 = vmul.f32 %v1310, %v1366
    %v1375 = vmul.f32 %v1311, %v1367
    %v1376 = vmul.f32 %v1312, %v1368
    %v1377 = vmul.f32 %v1313, %v1369
    %v1378 = vmul.f32 %v1314, %v1370
    %v1379 = vmul.f32 %v1315, %v1371
    %v1380 = vmul.f32 %v1316, %v1372
    %v1381 = vmul.f32 %v1317, %v1373
    %v1382 = vmul.f32 %v1374, %v390
    %v1383 = vmul.f32 %v1375, %v390
    %v1384 = vmul.f32 %v1376, %v390
    %v1385 = vmul.f32 %v1377, %v390
    %v1386 = vmul.f32 %v1378, %v390
    %v1387 = vmul.f32 %v1379, %v390
    %v1388 = vmul.f32 %v1380, %v390
    %v1389 = vmul.f32 %v1381, %v390
    %v1390 = vadd.f32 %v1382, %v404
    %v1391 = vadd.f32 %v1383, %v404
    %v1392 = vadd.f32 %v1384, %v404
    %v1393 = vadd.f32 %v1385, %v404
    %v1394 = vadd.f32 %v1386, %v404
    %v1395 = vadd.f32 %v1387, %v404
    %v1396 = vadd.f32 %v1388, %v404
    %v1397 = vadd.f32 %v1389, %v404
    %v1398 = vrot.slane %v1390, 7
    %v1399 = vrot.slane %v1391, 7
    %v1400 = vrot.slane %v1392, 7
    %v1401 = vrot.slane %v1393, 7
    %v1402 = vrot.slane %v1394, 7
    %v1403 = vrot.slane %v1395, 7
    %v1404 = vrot.slane %v1396, 7
    %v1405 = vrot.slane %v1397, 7
    %v1406 = vsel %vm194, %v1404, %v1405
    %v1407 = vsel %vm194, %v1403, %v1404
    %v1408 = vsel %vm194, %v1402, %v1403
    %v1409 = vsel %vm194, %v1401, %v1402
    %v1410 = vsel %vm194, %v1400, %v1401
    %v1411 = vsel %vm194, %v1399, %v1400
    %v1412 = vsel %vm194, %v1398, %v1399
    %v1413 = vsel %vm194, %v1405, %v1398
    %v1414 = vsel %vm170, %v1390, %v1413
    %v1415 = vsel %vm171, %v1391, %v1412
    %v1416 = vsel %vm172, %v1392, %v1411
    %v1417 = vsel %vm173, %v1393, %v1410
    %v1418 = vsel %vm174, %v1394, %v1409
    %v1419 = vsel %vm175, %v1395, %v1408
    %v1420 = vsel %vm176, %v1396, %v1407
    %v1421 = vsel %vm177, %v1397, %v1406
    %v1422 = vrot.slane %v1390, 1
    %v1423 = vrot.slane %v1391, 1
    %v1424 = vrot.slane %v1392, 1
    %v1425 = vrot.slane %v1393, 1
    %v1426 = vrot.slane %v1394, 1
    %v1427 = vrot.slane %v1395, 1
    %v1428 = vrot.slane %v1396, 1
    %v1429 = vrot.slane %v1397, 1
    %v1430 = vsel %vm219, %v1428, %v1429
    %v1431 = vsel %vm219, %v1427, %v1428
    %v1432 = vsel %vm219, %v1426, %v1427
    %v1433 = vsel %vm219, %v1425, %v1426
    %v1434 = vsel %vm219, %v1424, %v1425
    %v1435 = vsel %vm219, %v1423, %v1424
    %v1436 = vsel %vm219, %v1422, %v1423
    %v1437 = vsel %vm219, %v1429, %v1422
    %v1438 = vsel %vm178, %v1390, %v1436
    %v1439 = vsel %vm179, %v1391, %v1435
    %v1440 = vsel %vm180, %v1392, %v1434
    %v1441 = vsel %vm181, %v1393, %v1433
    %v1442 = vsel %vm182, %v1394, %v1432
    %v1443 = vsel %vm183, %v1395, %v1431
    %v1444 = vsel %vm184, %v1396, %v1430
    %v1445 = vsel %vm185, %v1397, %v1437
    %v1446 = vadd.f32 %v1414, %v1390
    %v1447 = vadd.f32 %v1415, %v1391
    %v1448 = vadd.f32 %v1416, %v1392
    %v1449 = vadd.f32 %v1417, %v1393
    %v1450 = vadd.f32 %v1418, %v1394
    %v1451 = vadd.f32 %v1419, %v1395
    %v1452 = vadd.f32 %v1420, %v1396
    %v1453 = vadd.f32 %v1421, %v1397
    %v1454 = vadd.f32 %v1446, %v1438
    %v1455 = vadd.f32 %v1447, %v1439
    %v1456 = vadd.f32 %v1448, %v1440
    %v1457 = vadd.f32 %v1449, %v1441
    %v1458 = vadd.f32 %v1450, %v1442
    %v1459 = vadd.f32 %v1451, %v1443
    %v1460 = vadd.f32 %v1452, %v1444
    %v1461 = vadd.f32 %v1453, %v1445
    %v1462 = vmul.f32 %v1454, 0.33333334
    %v1463 = vmul.f32 %v1455, 0.33333334
    %v1464 = vmul.f32 %v1456, 0.33333334
    %v1465 = vmul.f32 %v1457, 0.33333334
    %v1466 = vmul.f32 %v1458, 0.33333334
    %v1467 = vmul.f32 %v1459, 0.33333334
    %v1468 = vmul.f32 %v1460, 0.33333334
    %v1469 = vmul.f32 %v1461, 0.33333334
    %v1470 = vsub.f32 %v1390, %v1462
    %v1471 = vsub.f32 %v1391, %v1463
    %v1472 = vsub.f32 %v1392, %v1464
    %v1473 = vsub.f32 %v1393, %v1465
    %v1474 = vsub.f32 %v1394, %v1466
    %v1475 = vsub.f32 %v1395, %v1467
    %v1476 = vsub.f32 %v1396, %v1468
    %v1477 = vsub.f32 %v1397, %v1469
    %v1478 = vld [vmem:[%s6] sm:$0xff]
    %v1479 = vld [vmem:[%s6 + $0x8] sm:$0xff]
    %v1480 = vld [vmem:[%s6 + $0x10] sm:$0xff]
    %v1481 = vld [vmem:[%s6 + $0x18] sm:$0xff]
    %v1483 = vsel %vm280, %v1462, 0
    %v1486 = vsel %vm280, %v1463, 0
    %v1489 = vsel %vm280, %v1464, 0
    %v1492 = vsel %vm280, %v1465, 0
    %v1495 = vsel %vm280, %v1466, 0
    %v1498 = vsel %vm280, %v1467, 0
    %v1501 = vsel %vm280, %v1468, 0
    %v1504 = vsel %vm280, %v1469, 0
    %1506 = vmatprep.subr.mxu0 0.0
    %1507 = vmatpush1.msra.mxu0 %v1478
    %1508 = vmatprep.subr.mxu0 0.0
    %1509 = vmatpush1.msra.mxu0 %v1479
    %1510 = vmatprep.subr.mxu0 0.0
    %1511 = vmatpush1.msra.mxu0 %v1480
    %1512 = vmatprep.subr.mxu0 0.0
    %1513 = vmatpush1.msra.mxu0 %v1481
    %1514 = vmatprep.subr.mxu0 0.0
    %1515 = vmatpush1.msra.mxu0 0.0
    %1516 = vmatprep.subr.mxu0 0.0
    %1517 = vmatpush1.msra.mxu0 0.0
    %1518 = vmatprep.subr.mxu0 0.0
    %1519 = vmatpush1.msra.mxu0 0.0
    %1520 = vmatprep.subr.mxu0 0.0
    %1521 = vmatpush1.msra.mxu0 0.0
    %1522 = vmatprep.subr.mxu0 0.0
    %1523 = vmatpush1.msra.mxu0 0.0
    %1524 = vmatprep.subr.mxu0 0.0
    %1525 = vmatpush1.msra.mxu0 0.0
    %1526 = vmatprep.subr.mxu0 0.0
    %1527 = vmatpush1.msra.mxu0 0.0
    %1528 = vmatprep.subr.mxu0 0.0
    %1529 = vmatpush1.msra.mxu0 0.0
    %1530 = vmatprep.subr.mxu0 0.0
    %1531 = vmatpush1.msra.mxu0 0.0
    %1532 = vmatprep.subr.mxu0 0.0
    %1533 = vmatpush1.msra.mxu0 0.0
    %1534 = vmatprep.subr.mxu0 0.0
    %1535 = vmatpush1.msra.mxu0 0.0
    %1536 = vmatprep.subr.mxu0 0.0
    %1537 = vmatpush1.msra.mxu0 0.0
    %1538 = vmatprep.subr.mxu0 0.0
    %1539 = vmatpush1.msra.mxu0 0.0
    %1540 = vmatprep.subr.mxu0 0.0
    %1541 = vmatpush1.msra.mxu0 0.0
    %1542 = vmatprep.subr.mxu0 0.0
    %1543 = vmatpush1.msra.mxu0 0.0
    %1544 = vmatprep.subr.mxu0 0.0
    %1545 = vmatpush1.msra.mxu0 0.0
    %1546 = vmatprep.subr.mxu0 0.0
    %1547 = vmatpush1.msra.mxu0 0.0
    %1548 = vmatprep.subr.mxu0 0.0
    %1549 = vmatpush1.msra.mxu0 0.0
    %1550 = vmatprep.subr.mxu0 0.0
    %1551 = vmatpush1.msra.mxu0 0.0
    %1552 = vmatprep.subr.mxu0 0.0
    %1553 = vmatpush1.msra.mxu0 0.0
    %1554 = vmatprep.subr.mxu0 0.0
    %1555 = vmatpush1.msra.mxu0 0.0
    %1556 = vmatprep.subr.mxu0 0.0
    %1557 = vmatpush1.msra.mxu0 0.0
    %1558 = vmatprep.subr.mxu0 0.0
    %1559 = vmatpush1.msra.mxu0 0.0
    %1560 = vmatprep.subr.mxu0 0.0
    %1561 = vmatpush1.msra.mxu0 0.0
    %1562 = vmatprep.subr.mxu0 0.0
    %1563 = vmatpush1.msra.mxu0 0.0
    %1564 = vmatprep.subr.mxu0 0.0
    %1565 = vmatpush1.msra.mxu0 0.0
    %1566 = vmatprep.subr.mxu0 0.0
    %1567 = vmatpush1.msra.mxu0 0.0
    %1568 = vmatprep.subr.mxu0 0.0
    %1569 = vmatpush1.msra.mxu0 0.0
    %1570 = vmatprep.mubr.f32.mxu0 0.0
    %1571 = vmatmul.mubr.f32.gmra.mrb[0].mxu0 %v1483
    %v1572 = vpop.f32.mrb[0].mxu0
    %v1573 = vadd.f32 0.0, %v1572
    %v1574 = vpop.f32.mrb[0].mxu0
    %1575 = vmatprep.mubr.f32.mxu0 0.0
    %1576 = vmatmul.mubr.f32.gmra.mrb[0].mxu0 %v1486
    %v1577 = vpop.f32.mrb[0].mxu0
    %v1578 = vadd.f32 0.0, %v1577
    %v1579 = vpop.f32.mrb[0].mxu0
    %1580 = vmatprep.mubr.f32.mxu0 0.0
    %1581 = vmatmul.mubr.f32.gmra.mrb[0].mxu0 %v1489
    %v1582 = vpop.f32.mrb[0].mxu0
    %v1583 = vadd.f32 0.0, %v1582
    %v1584 = vpop.f32.mrb[0].mxu0
    %1585 = vmatprep.mubr.f32.mxu0 0.0
    %1586 = vmatmul.mubr.f32.gmra.mrb[0].mxu0 %v1492
    %v1587 = vpop.f32.mrb[0].mxu0
    %v1588 = vadd.f32 0.0, %v1587
    %v1589 = vpop.f32.mrb[0].mxu0
    %1590 = vmatprep.mubr.f32.mxu0 0.0
    %1591 = vmatmul.mubr.f32.gmra.mrb[0].mxu0 %v1495
    %v1592 = vpop.f32.mrb[0].mxu0
    %v1593 = vadd.f32 0.0, %v1592
    %v1594 = vpop.f32.mrb[0].mxu0
    %1595 = vmatprep.mubr.f32.mxu0 0.0
    %1596 = vmatmul.mubr.f32.gmra.mrb[0].mxu0 %v1498
    %v1597 = vpop.f32.mrb[0].mxu0
    %v1598 = vadd.f32 0.0, %v1597
    %v1599 = vpop.f32.mrb[0].mxu0
    %1600 = vmatprep.mubr.f32.mxu0 0.0
    %1601 = vmatmul.mubr.f32.gmra.mrb[0].mxu0 %v1501
    %v1602 = vpop.f32.mrb[0].mxu0
    %v1603 = vadd.f32 0.0, %v1602
    %v1604 = vpop.f32.mrb[0].mxu0
    %1605 = vmatprep.mubr.f32.mxu0 0.0
    %1606 = vmatmul.mubr.f32.gmra.mrb[0].mxu0 %v1504
    %v1607 = vpop.f32.mrb[0].mxu0
    %v1608 = vadd.f32 0.0, %v1607
    %v1609 = vpop.f32.mrb[0].mxu0
    %1610 = vdwg.mxu0
    %v1611 = vadd.f32 %v1097, %v1573
    %v1612 = vadd.f32 %v1098, %v1578
    %v1613 = vadd.f32 %v1099, %v1583
    %v1614 = vadd.f32 %v1100, %v1588
    %v1615 = vadd.f32 %v1101, %v1593
    %v1616 = vadd.f32 %v1102, %v1598
    %v1617 = vadd.f32 %v1103, %v1603
    %v1618 = vadd.f32 %v1104, %v1608
    %v1619 = vld [vmem:[#allocation2] sm:$0xff]
    %v1620 = vld [vmem:[#allocation2 + $0x8] sm:$0xff]
    %v1621 = vld [vmem:[#allocation2 + $0x10] sm:$0xff]
    %v1622 = vld [vmem:[#allocation2 + $0x18] sm:$0xff]
    %v1623 = vld [vmem:[%s9] sm:$0x1]
    %v1625 = vlaneseq
    %v1626 = vshrl.u32 %v1625, 7
    %v1627 = vsub.s32 0, %v1626
    %v1628 = vrot.slane %v1623, %v1627
    %v1631 = vsel %vm280, %v1470, 0
    %v1634 = vsel %vm280, %v1471, 0
    %v1637 = vsel %vm280, %v1472, 0
    %v1640 = vsel %vm280, %v1473, 0
    %v1643 = vsel %vm280, %v1474, 0
    %v1646 = vsel %vm280, %v1475, 0
    %v1649 = vsel %vm280, %v1476, 0
    %v1652 = vsel %vm280, %v1477, 0
    %1654 = vmatprep.subr.mxu0 0.0
    %1655 = vmatpush1.msra.mxu0 %v1619
    %1656 = vmatprep.subr.mxu0 0.0
    %1657 = vmatpush1.msra.mxu0 %v1620
    %1658 = vmatprep.subr.mxu0 0.0
    %1659 = vmatpush1.msra.mxu0 %v1621
    %1660 = vmatprep.subr.mxu0 0.0
    %1661 = vmatpush1.msra.mxu0 %v1622
    %1662 = vmatprep.subr.mxu0 0.0
    %1663 = vmatpush1.msra.mxu0 0.0
    %1664 = vmatprep.subr.mxu0 0.0
    %1665 = vmatpush1.msra.mxu0 0.0
    %1666 = vmatprep.subr.mxu0 0.0
    %1667 = vmatpush1.msra.mxu0 0.0
    %1668 = vmatprep.subr.mxu0 0.0
    %1669 = vmatpush1.msra.mxu0 0.0
    %1670 = vmatprep.subr.mxu0 0.0
    %1671 = vmatpush1.msra.mxu0 0.0
    %1672 = vmatprep.subr.mxu0 0.0
    %1673 = vmatpush1.msra.mxu0 0.0
    %1674 = vmatprep.subr.mxu0 0.0
    %1675 = vmatpush1.msra.mxu0 0.0
    %1676 = vmatprep.subr.mxu0 0.0
    %1677 = vmatpush1.msra.mxu0 0.0
    %1678 = vmatprep.subr.mxu0 0.0
    %1679 = vmatpush1.msra.mxu0 0.0
    %1680 = vmatprep.subr.mxu0 0.0
    %1681 = vmatpush1.msra.mxu0 0.0
    %1682 = vmatprep.subr.mxu0 0.0
    %1683 = vmatpush1.msra.mxu0 0.0
    %1684 = vmatprep.subr.mxu0 0.0
    %1685 = vmatpush1.msra.mxu0 0.0
    %1686 = vmatprep.subr.mxu0 0.0
    %1687 = vmatpush1.msra.mxu0 0.0
    %1688 = vmatprep.subr.mxu0 0.0
    %1689 = vmatpush1.msra.mxu0 0.0
    %1690 = vmatprep.subr.mxu0 0.0
    %1691 = vmatpush1.msra.mxu0 0.0
    %1692 = vmatprep.subr.mxu0 0.0
    %1693 = vmatpush1.msra.mxu0 0.0
    %1694 = vmatprep.subr.mxu0 0.0
    %1695 = vmatpush1.msra.mxu0 0.0
    %1696 = vmatprep.subr.mxu0 0.0
    %1697 = vmatpush1.msra.mxu0 0.0
    %1698 = vmatprep.subr.mxu0 0.0
    %1699 = vmatpush1.msra.mxu0 0.0
    %1700 = vmatprep.subr.mxu0 0.0
    %1701 = vmatpush1.msra.mxu0 0.0
    %1702 = vmatprep.subr.mxu0 0.0
    %1703 = vmatpush1.msra.mxu0 0.0
    %1704 = vmatprep.subr.mxu0 0.0
    %1705 = vmatpush1.msra.mxu0 0.0
    %1706 = vmatprep.subr.mxu0 0.0
    %1707 = vmatpush1.msra.mxu0 0.0
    %1708 = vmatprep.subr.mxu0 0.0
    %1709 = vmatpush1.msra.mxu0 0.0
    %1710 = vmatprep.subr.mxu0 0.0
    %1711 = vmatpush1.msra.mxu0 0.0
    %1712 = vmatprep.subr.mxu0 0.0
    %1713 = vmatpush1.msra.mxu0 0.0
    %1714 = vmatprep.subr.mxu0 0.0
    %1715 = vmatpush1.msra.mxu0 0.0
    %1716 = vmatprep.subr.mxu0 0.0
    %1717 = vmatpush1.msra.mxu0 0.0
    %1718 = vmatprep.mubr.f32.mxu0 0.0
    %1719 = vmatmul.mubr.f32.gmra.mrb[0].mxu0 %v1631
    %v1720 = vpop.f32.mrb[0].mxu0
    %v1721 = vadd.f32 %v1628, %v1720
    %v1722 = vpop.f32.mrb[0].mxu0
    %1723 = vmatprep.mubr.f32.mxu0 0.0
    %1724 = vmatmul.mubr.f32.gmra.mrb[0].mxu0 %v1634
    %v1725 = vpop.f32.mrb[0].mxu0
    %v1726 = vadd.f32 %v1628, %v1725
    %v1727 = vpop.f32.mrb[0].mxu0
    %1728 = vmatprep.mubr.f32.mxu0 0.0
    %1729 = vmatmul.mubr.f32.gmra.mrb[0].mxu0 %v1637
    %v1730 = vpop.f32.mrb[0].mxu0
    %v1731 = vadd.f32 %v1628, %v1730
    %v1732 = vpop.f32.mrb[0].mxu0
    %1733 = vmatprep.mubr.f32.mxu0 0.0
    %1734 = vmatmul.mubr.f32.gmra.mrb[0].mxu0 %v1640
    %v1735 = vpop.f32.mrb[0].mxu0
    %v1736 = vadd.f32 %v1628, %v1735
    %v1737 = vpop.f32.mrb[0].mxu0
    %1738 = vmatprep.mubr.f32.mxu0 0.0
    %1739 = vmatmul.mubr.f32.gmra.mrb[0].mxu0 %v1643
    %v1740 = vpop.f32.mrb[0].mxu0
    %v1741 = vadd.f32 %v1628, %v1740
    %v1742 = vpop.f32.mrb[0].mxu0
    %1743 = vmatprep.mubr.f32.mxu0 0.0
    %1744 = vmatmul.mubr.f32.gmra.mrb[0].mxu0 %v1646
    %v1745 = vpop.f32.mrb[0].mxu0
    %v1746 = vadd.f32 %v1628, %v1745
    %v1747 = vpop.f32.mrb[0].mxu0
    %1748 = vmatprep.mubr.f32.mxu0 0.0
    %1749 = vmatmul.mubr.f32.gmra.mrb[0].mxu0 %v1649
    %v1750 = vpop.f32.mrb[0].mxu0
    %v1751 = vadd.f32 %v1628, %v1750
    %v1752 = vpop.f32.mrb[0].mxu0
    %1753 = vmatprep.mubr.f32.mxu0 0.0
    %1754 = vmatmul.mubr.f32.gmra.mrb[0].mxu0 %v1652
    %v1755 = vpop.f32.mrb[0].mxu0
    %v1756 = vadd.f32 %v1628, %v1755
    %v1757 = vpop.f32.mrb[0].mxu0
    %1758 = vdwg.mxu0
    %v1759 = vmax.f32 %v1721, 0.0
    %v1760 = vmax.f32 %v1726, 0.0
    %v1761 = vmax.f32 %v1731, 0.0
    %v1762 = vmax.f32 %v1736, 0.0
    %v1763 = vmax.f32 %v1741, 0.0
    %v1764 = vmax.f32 %v1746, 0.0
    %v1765 = vmax.f32 %v1751, 0.0
    %v1766 = vmax.f32 %v1756, 0.0
    %v1767 = vld [vmem:[%s10] sm:$0xff]
    %v1768 = vld [vmem:[%s10 + $0x8] sm:$0xff]
    %v1769 = vld [vmem:[%s10 + $0x10] sm:$0xff]
    %v1770 = vld [vmem:[%s10 + $0x18] sm:$0xff]
    %v1771 = vld [vmem:[%s10 + $0x20] sm:$0xff]
    %v1772 = vld [vmem:[%s10 + $0x28] sm:$0xff]
    %v1773 = vld [vmem:[%s10 + $0x30] sm:$0xff]
    %v1774 = vld [vmem:[%s10 + $0x38] sm:$0xff]
    %v1775 = vld [vmem:[%s11] sm:$0x1]
    %v1777 = vlaneseq
    %v1778 = vshrl.u32 %v1777, 7
    %v1779 = vsub.s32 0, %v1778
    %v1780 = vrot.slane %v1775, %v1779
    %vm1782 = vcmask 523264
    %v1784 = vsel %vm1782, %v1759, 0
    %v1787 = vsel %vm1782, %v1760, 0
    %v1790 = vsel %vm1782, %v1761, 0
    %v1793 = vsel %vm1782, %v1762, 0
    %v1796 = vsel %vm1782, %v1763, 0
    %v1799 = vsel %vm1782, %v1764, 0
    %v1802 = vsel %vm1782, %v1765, 0
    %v1805 = vsel %vm1782, %v1766, 0
    %1807 = vmatprep.subr.mxu0 0.0
    %1808 = vmatpush1.msra.mxu0 %v1767
    %1809 = vmatprep.subr.mxu0 0.0
    %1810 = vmatpush1.msra.mxu0 %v1768
    %1811 = vmatprep.subr.mxu0 0.0
    %1812 = vmatpush1.msra.mxu0 %v1769
    %1813 = vmatprep.subr.mxu0 0.0
    %1814 = vmatpush1.msra.mxu0 %v1770
    %1815 = vmatprep.subr.mxu0 0.0
    %1816 = vmatpush1.msra.mxu0 %v1771
    %1817 = vmatprep.subr.mxu0 0.0
    %1818 = vmatpush1.msra.mxu0 %v1772
    %1819 = vmatprep.subr.mxu0 0.0
    %1820 = vmatpush1.msra.mxu0 %v1773
    %1821 = vmatprep.subr.mxu0 0.0
    %1822 = vmatpush1.msra.mxu0 %v1774
    %1823 = vmatprep.subr.mxu0 0.0
    %1824 = vmatpush1.msra.mxu0 0.0
    %1825 = vmatprep.subr.mxu0 0.0
    %1826 = vmatpush1.msra.mxu0 0.0
    %1827 = vmatprep.subr.mxu0 0.0
    %1828 = vmatpush1.msra.mxu0 0.0
    %1829 = vmatprep.subr.mxu0 0.0
    %1830 = vmatpush1.msra.mxu0 0.0
    %1831 = vmatprep.subr.mxu0 0.0
    %1832 = vmatpush1.msra.mxu0 0.0
    %1833 = vmatprep.subr.mxu0 0.0
    %1834 = vmatpush1.msra.mxu0 0.0
    %1835 = vmatprep.subr.mxu0 0.0
    %1836 = vmatpush1.msra.mxu0 0.0
    %1837 = vmatprep.subr.mxu0 0.0
    %1838 = vmatpush1.msra.mxu0 0.0
    %1839 = vmatprep.subr.mxu0 0.0
    %1840 = vmatpush1.msra.mxu0 0.0
    %1841 = vmatprep.subr.mxu0 0.0
    %1842 = vmatpush1.msra.mxu0 0.0
    %1843 = vmatprep.subr.mxu0 0.0
    %1844 = vmatpush1.msra.mxu0 0.0
    %1845 = vmatprep.subr.mxu0 0.0
    %1846 = vmatpush1.msra.mxu0 0.0
    %1847 = vmatprep.subr.mxu0 0.0
    %1848 = vmatpush1.msra.mxu0 0.0
    %1849 = vmatprep.subr.mxu0 0.0
    %1850 = vmatpush1.msra.mxu0 0.0
    %1851 = vmatprep.subr.mxu0 0.0
    %1852 = vmatpush1.msra.mxu0 0.0
    %1853 = vmatprep.subr.mxu0 0.0
    %1854 = vmatpush1.msra.mxu0 0.0
    %1855 = vmatprep.subr.mxu0 0.0
    %1856 = vmatpush1.msra.mxu0 0.0
    %1857 = vmatprep.subr.mxu0 0.0
    %1858 = vmatpush1.msra.mxu0 0.0
    %1859 = vmatprep.subr.mxu0 0.0
    %1860 = vmatpush1.msra.mxu0 0.0
    %1861 = vmatprep.subr.mxu0 0.0
    %1862 = vmatpush1.msra.mxu0 0.0
    %1863 = vmatprep.subr.mxu0 0.0
    %1864 = vmatpush1.msra.mxu0 0.0
    %1865 = vmatprep.subr.mxu0 0.0
    %1866 = vmatpush1.msra.mxu0 0.0
    %1867 = vmatprep.subr.mxu0 0.0
    %1868 = vmatpush1.msra.mxu0 0.0
    %1869 = vmatprep.subr.mxu0 0.0
    %1870 = vmatpush1.msra.mxu0 0.0
    %1871 = vmatprep.mubr.f32.mxu0 0.0
    %1872 = vmatmul.mubr.f32.gmra.mrb[0].mxu0 %v1784
    %v1873 = vpop.f32.mrb[0].mxu0
    %v1874 = vadd.f32 %v1780, %v1873
    %v1875 = vpop.f32.mrb[0].mxu0
    %1876 = vmatprep.mubr.f32.mxu0 0.0
    %1877 = vmatmul.mubr.f32.gmra.mrb[0].mxu0 %v1787
    %v1878 = vpop.f32.mrb[0].mxu0
    %v1879 = vadd.f32 %v1780, %v1878
    %v1880 = vpop.f32.mrb[0].mxu0
    %1881 = vmatprep.mubr.f32.mxu0 0.0
    %1882 = vmatmul.mubr.f32.gmra.mrb[0].mxu0 %v1790
    %v1883 = vpop.f32.mrb[0].mxu0
    %v1884 = vadd.f32 %v1780, %v1883
    %v1885 = vpop.f32.mrb[0].mxu0
    %1886 = vmatprep.mubr.f32.mxu0 0.0
    %1887 = vmatmul.mubr.f32.gmra.mrb[0].mxu0 %v1793
    %v1888 = vpop.f32.mrb[0].mxu0
    %v1889 = vadd.f32 %v1780, %v1888
    %v1890 = vpop.f32.mrb[0].mxu0
    %1891 = vmatprep.mubr.f32.mxu0 0.0
    %1892 = vmatmul.mubr.f32.gmra.mrb[0].mxu0 %v1796
    %v1893 = vpop.f32.mrb[0].mxu0
    %v1894 = vadd.f32 %v1780, %v1893
    %v1895 = vpop.f32.mrb[0].mxu0
    %1896 = vmatprep.mubr.f32.mxu0 0.0
    %1897 = vmatmul.mubr.f32.gmra.mrb[0].mxu0 %v1799
    %v1898 = vpop.f32.mrb[0].mxu0
    %v1899 = vadd.f32 %v1780, %v1898
    %v1900 = vpop.f32.mrb[0].mxu0
    %1901 = vmatprep.mubr.f32.mxu0 0.0
    %1902 = vmatmul.mubr.f32.gmra.mrb[0].mxu0 %v1802
    %v1903 = vpop.f32.mrb[0].mxu0
    %v1904 = vadd.f32 %v1780, %v1903
    %v1905 = vpop.f32.mrb[0].mxu0
    %1906 = vmatprep.mubr.f32.mxu0 0.0
    %1907 = vmatmul.mubr.f32.gmra.mrb[0].mxu0 %v1805
    %v1908 = vpop.f32.mrb[0].mxu0
    %v1909 = vadd.f32 %v1780, %v1908
    %v1910 = vpop.f32.mrb[0].mxu0
    %1911 = vdwg.mxu0
    %v1912 = vadd.f32 %v1470, %v1874
    %v1913 = vadd.f32 %v1471, %v1879
    %v1914 = vadd.f32 %v1472, %v1884
    %v1915 = vadd.f32 %v1473, %v1889
    %v1916 = vadd.f32 %v1474, %v1894
    %v1917 = vadd.f32 %v1475, %v1899
    %v1918 = vadd.f32 %v1476, %v1904
    %v1919 = vadd.f32 %v1477, %v1909
    %v1920 = vsel %vm280, %v1912, 0.0
    %1921 = vadd.xlane.f32.xlu0 %v1920
    %v1922 = vpop.xlane.xlu0 %1921
    %v1923 = vsel %vm280, %v1913, 0.0
    %1924 = vadd.xlane.f32.xlu0 %v1923
    %v1925 = vpop.xlane.xlu0 %1924
    %v1926 = vsel %vm280, %v1914, 0.0
    %1927 = vadd.xlane.f32.xlu0 %v1926
    %v1928 = vpop.xlane.xlu0 %1927
    %v1929 = vsel %vm280, %v1915, 0.0
    %1930 = vadd.xlane.f32.xlu0 %v1929
    %v1931 = vpop.xlane.xlu0 %1930
    %v1932 = vsel %vm280, %v1916, 0.0
    %1933 = vadd.xlane.f32.xlu0 %v1932
    %v1934 = vpop.xlane.xlu0 %1933
    %v1935 = vsel %vm280, %v1917, 0.0
    %1936 = vadd.xlane.f32.xlu0 %v1935
    %v1937 = vpop.xlane.xlu0 %1936
    %v1938 = vsel %vm280, %v1918, 0.0
    %1939 = vadd.xlane.f32.xlu0 %v1938
    %v1940 = vpop.xlane.xlu0 %1939
    %v1941 = vsel %vm280, %v1919, 0.0
    %1942 = vadd.xlane.f32.xlu0 %v1941
    %v1943 = vpop.xlane.xlu0 %1942
    %v1944 = vmul.f32 %v1922, %v305
    %v1945 = vmul.f32 %v1925, %v305
    %v1946 = vmul.f32 %v1928, %v305
    %v1947 = vmul.f32 %v1931, %v305
    %v1948 = vmul.f32 %v1934, %v305
    %v1949 = vmul.f32 %v1937, %v305
    %v1950 = vmul.f32 %v1940, %v305
    %v1951 = vmul.f32 %v1943, %v305
    %v1952 = vsub.f32 %v1912, %v1944
    %v1953 = vsub.f32 %v1913, %v1945
    %v1954 = vsub.f32 %v1914, %v1946
    %v1955 = vsub.f32 %v1915, %v1947
    %v1956 = vsub.f32 %v1916, %v1948
    %v1957 = vsub.f32 %v1917, %v1949
    %v1958 = vsub.f32 %v1918, %v1950
    %v1959 = vsub.f32 %v1919, %v1951
    %v1960 = vmul.f32 %v1952, %v1952
    %v1961 = vmul.f32 %v1953, %v1953
    %v1962 = vmul.f32 %v1954, %v1954
    %v1963 = vmul.f32 %v1955, %v1955
    %v1964 = vmul.f32 %v1956, %v1956
    %v1965 = vmul.f32 %v1957, %v1957
    %v1966 = vmul.f32 %v1958, %v1958
    %v1967 = vmul.f32 %v1959, %v1959
    %v1968 = vsel %vm280, %v1960, 0.0
    %1969 = vadd.xlane.f32.xlu0 %v1968
    %v1970 = vpop.xlane.xlu0 %1969
    %v1971 = vsel %vm280, %v1961, 0.0
    %1972 = vadd.xlane.f32.xlu0 %v1971
    %v1973 = vpop.xlane.xlu0 %1972
    %v1974 = vsel %vm280, %v1962, 0.0
    %1975 = vadd.xlane.f32.xlu0 %v1974
    %v1976 = vpop.xlane.xlu0 %1975
    %v1977 = vsel %vm280, %v1963, 0.0
    %1978 = vadd.xlane.f32.xlu0 %v1977
    %v1979 = vpop.xlane.xlu0 %1978
    %v1980 = vsel %vm280, %v1964, 0.0
    %1981 = vadd.xlane.f32.xlu0 %v1980
    %v1982 = vpop.xlane.xlu0 %1981
    %v1983 = vsel %vm280, %v1965, 0.0
    %1984 = vadd.xlane.f32.xlu0 %v1983
    %v1985 = vpop.xlane.xlu0 %1984
    %v1986 = vsel %vm280, %v1966, 0.0
    %1987 = vadd.xlane.f32.xlu0 %v1986
    %v1988 = vpop.xlane.xlu0 %1987
    %v1989 = vsel %vm280, %v1967, 0.0
    %1990 = vadd.xlane.f32.xlu0 %v1989
    %v1991 = vpop.xlane.xlu0 %1990
    %v1992 = vmul.f32 %v1970, %v305
    %v1993 = vmul.f32 %v1973, %v305
    %v1994 = vmul.f32 %v1976, %v305
    %v1995 = vmul.f32 %v1979, %v305
    %v1996 = vmul.f32 %v1982, %v305
    %v1997 = vmul.f32 %v1985, %v305
    %v1998 = vmul.f32 %v1988, %v305
    %v1999 = vmul.f32 %v1991, %v305
    %v2000 = vadd.f32 %v1992, 1e-05
    %v2001 = vadd.f32 %v1993, 1e-05
    %v2002 = vadd.f32 %v1994, 1e-05
    %v2003 = vadd.f32 %v1995, 1e-05
    %v2004 = vadd.f32 %v1996, 1e-05
    %v2005 = vadd.f32 %v1997, 1e-05
    %v2006 = vadd.f32 %v1998, 1e-05
    %v2007 = vadd.f32 %v1999, 1e-05
    %v2008 = vrsqrt.pop %v2000
    %v2009 = vrsqrt.pop %v2001
    %v2010 = vrsqrt.pop %v2002
    %v2011 = vrsqrt.pop %v2003
    %v2012 = vrsqrt.pop %v2004
    %v2013 = vrsqrt.pop %v2005
    %v2014 = vrsqrt.pop %v2006
    %v2015 = vrsqrt.pop %v2007
    %v2016 = vmul.f32 %v1952, %v2008
    %v2017 = vmul.f32 %v1953, %v2009
    %v2018 = vmul.f32 %v1954, %v2010
    %v2019 = vmul.f32 %v1955, %v2011
    %v2020 = vmul.f32 %v1956, %v2012
    %v2021 = vmul.f32 %v1957, %v2013
    %v2022 = vmul.f32 %v1958, %v2014
    %v2023 = vmul.f32 %v1959, %v2015
    %v2024 = vmul.f32 %v2016, %v390
    %v2025 = vmul.f32 %v2017, %v390
    %v2026 = vmul.f32 %v2018, %v390
    %v2027 = vmul.f32 %v2019, %v390
    %v2028 = vmul.f32 %v2020, %v390
    %v2029 = vmul.f32 %v2021, %v390
    %v2030 = vmul.f32 %v2022, %v390
    %v2031 = vmul.f32 %v2023, %v390
    %v2032 = vadd.f32 %v2024, %v404
    %v2033 = vadd.f32 %v2025, %v404
    %v2034 = vadd.f32 %v2026, %v404
    %v2035 = vadd.f32 %v2027, %v404
    %v2036 = vadd.f32 %v2028, %v404
    %v2037 = vadd.f32 %v2029, %v404
    %v2038 = vadd.f32 %v2030, %v404
    %v2039 = vadd.f32 %v2031, %v404
    %v2040 = vadd.f32 %v2032, %v1611
    %v2041 = vadd.f32 %v2033, %v1612
    %v2042 = vadd.f32 %v2034, %v1613
    %v2043 = vadd.f32 %v2035, %v1614
    %v2044 = vadd.f32 %v2036, %v1615
    %v2045 = vadd.f32 %v2037, %v1616
    %v2046 = vadd.f32 %v2038, %v1617
    %v2047 = vadd.f32 %v2039, %v1618
    %2048 = vst.msk [vmem:[%s12] sm:$0xff] %vm280, %v2040
    %2049 = vst.msk [vmem:[%s12 + $0x8] sm:$0xff] %vm280, %v2041
    %2050 = vst.msk [vmem:[%s12 + $0x10] sm:$0xff] %vm280, %v2042
    %2051 = vst.msk [vmem:[%s12 + $0x18] sm:$0xff] %vm280, %v2043
    %2052 = vst.msk [vmem:[%s12 + $0x20] sm:$0xff] %vm280, %v2044
    %2053 = vst.msk [vmem:[%s12 + $0x28] sm:$0xff] %vm280, %v2045
    %2054 = vst.msk [vmem:[%s12 + $0x30] sm:$0xff] %vm280, %v2046
    %2055 = vst.msk [vmem:[%s12 + $0x38] sm:$0xff] %vm280, %v2047
    // Predicated region
    $region54: #{tpu_custom_call.1} parent=1 // pred_check
      _
    $region55: #{tpu_custom_call.1} parent=1 // pred_check_branch
      %2057 = sbr.rel (0) target = $region57
    $region56: #{tpu_custom_call.1} parent=1 // pred_region
      _
    $region57: #{tpu_custom_call.1} parent=1 // pred_fallthru
      _
    // Predicated region
    $region58: #{tpu_custom_call.1} parent=1 // pred_check
      _
    $region59: #{tpu_custom_call.1} parent=1 // pred_check_branch
      %2059 = sbr.rel (0) target = $region61
    $region60: #{tpu_custom_call.1} parent=1 // pred_region
      _
    $region61: #{tpu_custom_call.1} parent=1 // pred_fallthru
      _
    %2060 = vsyncpa [#allocation3], 1

</llo_original>
